<compile_context>
chip_gen: v5e
topology: v5e:2x2
jax: 0.10.0
libtpu: 0.0.40
codegen_flags: <defaults>
</compile_context>

<pallas_src>
import math

import jax
import jax.numpy as jnp
from jax import lax
from jax.experimental import pallas as pl
from jax.experimental.pallas import tpu as pltpu

# ---------------- model config ----------------------------------------------
VOCAB = 50          # input_size
HIDDEN = 32         # hidden_size
SEQ = 8             # sequence length
NUM_LAYERS = 2
NHEAD = 4
HEAD_DIM = HIDDEN // NHEAD
FF = 4 * HIDDEN
LN_EPS = 1e-5
WIDE_LANES = 128

# packed-buffer layout (rows)
WIDE_ROWS_PER_LAYER = 80       # 32 w_qkv^T | 1 b_qkv | 7 pad | 32 w_ff1^T | 1 b_ff1 | 7 pad
NARROW_ROWS_PER_LAYER = 168    # 32 w_out^T | 128 w_ff2^T | 6 biases/ln | 2 pad
NARROW_FC_BASE = NUM_LAYERS * NARROW_ROWS_PER_LAYER   # 336: 32 fc_w^T | 1 fc_b | 7 pad


# ---------------- Pallas kernel ----------------------------------------------
def _layer_norm(x, gamma, beta):
    # LayerNorm over last dim, biased variance (PyTorch semantics), eps=1e-5.
    mu = jnp.mean(x, axis=-1, keepdims=True)
    xc = x - mu
    var = jnp.mean(xc * xc, axis=-1, keepdims=True)
    return xc * lax.rsqrt(var + LN_EPS) * gamma + beta


def transformer_encoder_kernel(tok_ref, emb_ref, pe_ref, wide_ref, narrow_ref,
                               out_ref, x_scr):
    # ---- fused embedding gather + positional encoding -----------------------
    # TODO(synk): dropout layers are omitted (inference / eval semantics).
    for i in range(SEQ):
        x_scr[pl.ds(i, 1), :] = emb_ref[pl.ds(tok_ref[i], 1), :]
    x = x_scr[...] + pe_ref[...]                                  # (S, H)

    for l in range(NUM_LAYERS):                                   # static unroll
        wb = l * WIDE_ROWS_PER_LAYER
        nb = l * NARROW_ROWS_PER_LAYER

        w_qkv = wide_ref[wb:wb + 32, :]          # (H, 128); cols 0:96 = in_proj_w.T (q pre-scaled)
        b_qkv = wide_ref[wb + 32:wb + 33, :]     # (1, 128)
        w_ff1 = wide_ref[wb + 40:wb + 72, :]     # (H, FF)  = lin1_w.T
        b_ff1 = wide_ref[wb + 72:wb + 73, :]     # (1, FF)

        w_out = narrow_ref[nb:nb + 32, :]        # (H, H)   = out_proj_w.T
        w_ff2 = narrow_ref[nb + 32:nb + 160, :]  # (FF, H)  = lin2_w.T
        b_out = narrow_ref[nb + 160:nb + 161, :]
        b_ff2 = narrow_ref[nb + 161:nb + 162, :]
        ln1_g = narrow_ref[nb + 162:nb + 163, :]
        ln1_b = narrow_ref[nb + 163:nb + 164, :]
        ln2_g = narrow_ref[nb + 164:nb + 165, :]
        ln2_b = narrow_ref[nb + 165:nb + 166, :]

        # ---- multi-head self-attention (post-norm, PyTorch default) --------
        qkv = jnp.dot(x, w_qkv, preferred_element_type=jnp.float32) + b_qkv  # (S, 128)

        attn = jnp.zeros((SEQ, HIDDEN), jnp.float32) + b_out      # start with bias
        for h in range(NHEAD):                                    # static unroll
            lo = h * HEAD_DIM
            qh = qkv[:, lo:lo + HEAD_DIM]
            kh = qkv[:, HIDDEN + lo:HIDDEN + lo + HEAD_DIM]
            vh = qkv[:, 2 * HIDDEN + lo:2 * HIDDEN + lo + HEAD_DIM]
            # scores: contract head dims of q and k (no transpose materialized)
            s = lax.dot_general(qh, kh, (((1,), (1,)), ((), ())),
                                preferred_element_type=jnp.float32)  # (S, S)
            s = s - jnp.max(s, axis=-1, keepdims=True)
            p = jnp.exp(s)
            p = p * pl.reciprocal(jnp.sum(p, axis=-1, keepdims=True), approx=True)
            oh = jnp.dot(p, vh, preferred_element_type=jnp.float32)  # (S, HEAD_DIM)
            # accumulate this head's contribution to out_proj (no concatenate)
            attn = attn + jnp.dot(oh, w_out[lo:lo + HEAD_DIM, :],
                                  preferred_element_type=jnp.float32)

        x = _layer_norm(x + attn, ln1_g, ln1_b)

        # ---- feed-forward (relu) --------------------------------------------
        h1 = jnp.maximum(
            jnp.dot(x, w_ff1, preferred_element_type=jnp.float32) + b_ff1, 0.0)
        ff = jnp.dot(h1, w_ff2, preferred_element_type=jnp.float32) + b_ff2
        x = _layer_norm(x + ff, ln2_g, ln2_b)

    # ---- heads: last token + fc(mean over seq), single packed output --------
    fc_w = narrow_ref[NARROW_FC_BASE:NARROW_FC_BASE + 32, :]       # (H, H) = fc_w.T
    fc_b = narrow_ref[NARROW_FC_BASE + 32:NARROW_FC_BASE + 33, :]  # (1, H)
    rep = jnp.mean(x, axis=0, keepdims=True)                       # (1, H)
    rep = jnp.dot(rep, fc_w, preferred_element_type=jnp.float32) + fc_b
    out_ref[0:1, :] = x[SEQ - 1:SEQ, :]
    out_ref[1:2, :] = rep


# ---------------- parameter construction / packing ---------------------------
def make_params(key):
    ks = jax.random.split(key, 16)
    s = 0.05
    return {
        "emb":       jax.random.normal(ks[0], (VOCAB, HIDDEN), jnp.float32) * s,
        "inproj_w":  jax.random.normal(ks[1], (NUM_LAYERS, 3 * HIDDEN, HIDDEN), jnp.float32) * s,
        "inproj_b":  jax.random.normal(ks[2], (NUM_LAYERS, 1, 3 * HIDDEN), jnp.float32) * s,
        "outproj_w": jax.random.normal(ks[3], (NUM_LAYERS, HIDDEN, HIDDEN), jnp.float32) * s,
        "outproj_b": jax.random.normal(ks[4], (NUM_LAYERS, 1, HIDDEN), jnp.float32) * s,
        "lin1_w":    jax.random.normal(ks[5], (NUM_LAYERS, FF, HIDDEN), jnp.float32) * s,
        "lin1_b":    jax.random.normal(ks[6], (NUM_LAYERS, 1, FF), jnp.float32) * s,
        "lin2_w":    jax.random.normal(ks[7], (NUM_LAYERS, HIDDEN, FF), jnp.float32) * s,
        "lin2_b":    jax.random.normal(ks[8], (NUM_LAYERS, 1, HIDDEN), jnp.float32) * s,
        "ln1_w":     jnp.ones((NUM_LAYERS, 1, HIDDEN), jnp.float32),
        "ln1_b":     jnp.zeros((NUM_LAYERS, 1, HIDDEN), jnp.float32),
        "ln2_w":     jnp.ones((NUM_LAYERS, 1, HIDDEN), jnp.float32),
        "ln2_b":     jnp.zeros((NUM_LAYERS, 1, HIDDEN), jnp.float32),
        "fc_w":      jax.random.normal(ks[9], (HIDDEN, HIDDEN), jnp.float32) * s,
        "fc_b":      jax.random.normal(ks[10], (1, HIDDEN), jnp.float32) * s,
    }


def positional_encoding(seq_len, d_model):
    position = jnp.arange(seq_len, dtype=jnp.float32)[:, None]
    div_term = jnp.exp(jnp.arange(0, d_model, 2, dtype=jnp.float32)
                       * (-math.log(10000.0) / d_model))
    pe = jnp.zeros((seq_len, d_model), jnp.float32)
    pe = pe.at[:, 0::2].set(jnp.sin(position * div_term))
    pe = pe.at[:, 1::2].set(jnp.cos(position * div_term))
    return pe


def pack_params(p):
    """Host-side, one-off: pre-transpose, fold q-scale, pack into 2 flat buffers."""
    scale = 1.0 / math.sqrt(HEAD_DIM)
    pad_w = jnp.zeros((7, WIDE_LANES), jnp.float32)
    wide_rows, narrow_rows = [], []
    for l in range(NUM_LAYERS):
        w_in_t = p["inproj_w"][l].T                        # (H, 3H)
        b_in = p["inproj_b"][l]                            # (1, 3H)
        # fold 1/sqrt(head_dim) into the q columns
        w_in_t = w_in_t.at[:, :HIDDEN].multiply(scale)
        b_in = b_in.at[:, :HIDDEN].multiply(scale)
        w_in_t = jnp.pad(w_in_t, ((0, 0), (0, WIDE_LANES - 3 * HIDDEN)))
        b_in = jnp.pad(b_in, ((0, 0), (0, WIDE_LANES - 3 * HIDDEN)))
        wide_rows += [w_in_t, b_in, pad_w,
                      p["lin1_w"][l].T, p["lin1_b"][l], pad_w]
        narrow_rows += [
            p["outproj_w"][l].T,                           # (H, H)
            p["lin2_w"][l].T,                              # (FF, H)
            p["outproj_b"][l], p["lin2_b"][l],
            p["ln1_w"][l], p["ln1_b"][l],
            p["ln2_w"][l], p["ln2_b"][l],
            jnp.zeros((2, HIDDEN), jnp.float32),
        ]
    narrow_rows += [p["fc_w"].T, p["fc_b"], jnp.zeros((7, HIDDEN), jnp.float32)]
    return {
        "emb": p["emb"],
        "wide": jnp.concatenate(wide_rows, axis=0),        # (160, 128)
        "narrow": jnp.concatenate(narrow_rows, axis=0),    # (376, 32)
    }


# ---------------- wrapper -----------------------------------------------------
@jax.jit
def transformer_encoder_forward(tokens, emb, pe, wide, narrow):
    out = pl.pallas_call(
        transformer_encoder_kernel,
        out_shape=jax.ShapeDtypeStruct((2, HIDDEN), jnp.float32),
        in_specs=[
            pl.BlockSpec(memory_space=pltpu.MemorySpace.SMEM),   # token ids
            pl.BlockSpec(memory_space=pltpu.MemorySpace.VMEM),   # embedding table
            pl.BlockSpec(memory_space=pltpu.MemorySpace.VMEM),   # positional encoding
            pl.BlockSpec(memory_space=pltpu.MemorySpace.VMEM),   # packed 128-wide weights
            pl.BlockSpec(memory_space=pltpu.MemorySpace.VMEM),   # packed 32-wide weights
        ],
        out_specs=pl.BlockSpec(memory_space=pltpu.MemorySpace.VMEM),
        scratch_shapes=[pltpu.VMEM((SEQ, HIDDEN), jnp.float32)],
    )(tokens, emb, pe, wide, narrow)
    # Match PyTorch return shapes:
    #   transformer_output[-1].unsqueeze(0)      -> (1, 1, H)
    #   sentence_representation.unsqueeze(0)     -> (1, 1, H)
    return out[0:1].reshape(1, 1, HIDDEN), out[1:2].reshape(1, 1, HIDDEN)


if __name__ == "__main__":
    key = jax.random.PRNGKey(0)
    pkey, tkey = jax.random.split(key)
    params = make_params(pkey)
    packed = pack_params(params)          # one-off host-side packing
    pe = positional_encoding(SEQ, HIDDEN)
    tokens = jax.random.randint(tkey, (SEQ,), 0, VOCAB, dtype=jnp.int32)

    last, rep = transformer_encoder_forward(
        tokens, packed["emb"], pe, packed["wide"], packed["narrow"])
    jax.block_until_ready((last, rep))

    assert last.shape == (1, 1, HIDDEN) and rep.shape == (1, 1, HIDDEN)
    assert jnp.all(jnp.isfinite(last)) and jnp.all(jnp.isfinite(rep))
    print("KERNEL_OK")
</pallas_src>

<mosaic_0001>
module attributes {stable_mosaic.version = 11 : i64} {
  func.func @transformer_encoder_kernel(%arg0: memref<8xi32, #tpu.memory_space<smem>>, %arg1: memref<50x32xf32, #tpu.memory_space<vmem>>, %arg2: memref<8x32xf32, #tpu.memory_space<vmem>>, %arg3: memref<160x128xf32, #tpu.memory_space<vmem>>, %arg4: memref<376x32xf32, #tpu.memory_space<vmem>>, %arg5: memref<2x32xf32, #tpu.memory_space<vmem>>, %arg6: memref<8x32xf32, #tpu.memory_space<vmem>>) attributes {dimension_semantics = [], scalar_prefetch = 0 : i64, scratch_operands = 1 : i64, tpu.core_type = #tpu.core_type<tc>} {
    %c0 = arith.constant 0 : index
    %0 = memref.load %arg0[%c0] : memref<8xi32, #tpu.memory_space<smem>>
    %1 = arith.index_cast %0 : i32 to index
    %c0_0 = arith.constant 0 : index
    %2 = vector.load %arg1[%1, %c0_0] : memref<50x32xf32, #tpu.memory_space<vmem>>, vector<1x32xf32>
    %c0_1 = arith.constant 0 : index
    %c0_2 = arith.constant 0 : index
    %3 = vector.load %arg6[%c0_1, %c0_2] : memref<8x32xf32, #tpu.memory_space<vmem>>, vector<1x32xf32>
    tpu.vector_store %arg6[%c0_1, %c0_2], %2 {strides = array<i32>} : memref<8x32xf32, #tpu.memory_space<vmem>>, vector<1x32xf32>,
    %c1 = arith.constant 1 : index
    %4 = memref.load %arg0[%c1] : memref<8xi32, #tpu.memory_space<smem>>
    %5 = arith.index_cast %4 : i32 to index
    %c0_3 = arith.constant 0 : index
    %6 = vector.load %arg1[%5, %c0_3] : memref<50x32xf32, #tpu.memory_space<vmem>>, vector<1x32xf32>
    %c1_4 = arith.constant 1 : index
    %c0_5 = arith.constant 0 : index
    %7 = vector.load %arg6[%c1_4, %c0_5] : memref<8x32xf32, #tpu.memory_space<vmem>>, vector<1x32xf32>
    tpu.vector_store %arg6[%c1_4, %c0_5], %6 {strides = array<i32>} : memref<8x32xf32, #tpu.memory_space<vmem>>, vector<1x32xf32>,
    %c2 = arith.constant 2 : index
    %8 = memref.load %arg0[%c2] : memref<8xi32, #tpu.memory_space<smem>>
    %9 = arith.index_cast %8 : i32 to index
    %c0_6 = arith.constant 0 : index
    %10 = vector.load %arg1[%9, %c0_6] : memref<50x32xf32, #tpu.memory_space<vmem>>, vector<1x32xf32>
    %c2_7 = arith.constant 2 : index
    %c0_8 = arith.constant 0 : index
    %11 = vector.load %arg6[%c2_7, %c0_8] : memref<8x32xf32, #tpu.memory_space<vmem>>, vector<1x32xf32>
    tpu.vector_store %arg6[%c2_7, %c0_8], %10 {strides = array<i32>} : memref<8x32xf32, #tpu.memory_space<vmem>>, vector<1x32xf32>,
    %c3 = arith.constant 3 : index
    %12 = memref.load %arg0[%c3] : memref<8xi32, #tpu.memory_space<smem>>
    %13 = arith.index_cast %12 : i32 to index
    %c0_9 = arith.constant 0 : index
    %14 = vector.load %arg1[%13, %c0_9] : memref<50x32xf32, #tpu.memory_space<vmem>>, vector<1x32xf32>
    %c3_10 = arith.constant 3 : index
    %c0_11 = arith.constant 0 : index
    %15 = vector.load %arg6[%c3_10, %c0_11] : memref<8x32xf32, #tpu.memory_space<vmem>>, vector<1x32xf32>
    tpu.vector_store %arg6[%c3_10, %c0_11], %14 {strides = array<i32>} : memref<8x32xf32, #tpu.memory_space<vmem>>, vector<1x32xf32>,
    %c4 = arith.constant 4 : index
    %16 = memref.load %arg0[%c4] : memref<8xi32, #tpu.memory_space<smem>>
    %17 = arith.index_cast %16 : i32 to index
    %c0_12 = arith.constant 0 : index
    %18 = vector.load %arg1[%17, %c0_12] : memref<50x32xf32, #tpu.memory_space<vmem>>, vector<1x32xf32>
    %c4_13 = arith.constant 4 : index
    %c0_14 = arith.constant 0 : index
    %19 = vector.load %arg6[%c4_13, %c0_14] : memref<8x32xf32, #tpu.memory_space<vmem>>, vector<1x32xf32>
    tpu.vector_store %arg6[%c4_13, %c0_14], %18 {strides = array<i32>} : memref<8x32xf32, #tpu.memory_space<vmem>>, vector<1x32xf32>,
    %c5 = arith.constant 5 : index
    %20 = memref.load %arg0[%c5] : memref<8xi32, #tpu.memory_space<smem>>
    %21 = arith.index_cast %20 : i32 to index
    %c0_15 = arith.constant 0 : index
    %22 = vector.load %arg1[%21, %c0_15] : memref<50x32xf32, #tpu.memory_space<vmem>>, vector<1x32xf32>
    %c5_16 = arith.constant 5 : index
    %c0_17 = arith.constant 0 : index
    %23 = vector.load %arg6[%c5_16, %c0_17] : memref<8x32xf32, #tpu.memory_space<vmem>>, vector<1x32xf32>
    tpu.vector_store %arg6[%c5_16, %c0_17], %22 {strides = array<i32>} : memref<8x32xf32, #tpu.memory_space<vmem>>, vector<1x32xf32>,
    %c6 = arith.constant 6 : index
    %24 = memref.load %arg0[%c6] : memref<8xi32, #tpu.memory_space<smem>>
    %25 = arith.index_cast %24 : i32 to index
    %c0_18 = arith.constant 0 : index
    %26 = vector.load %arg1[%25, %c0_18] : memref<50x32xf32, #tpu.memory_space<vmem>>, vector<1x32xf32>
    %c6_19 = arith.constant 6 : index
    %c0_20 = arith.constant 0 : index
    %27 = vector.load %arg6[%c6_19, %c0_20] : memref<8x32xf32, #tpu.memory_space<vmem>>, vector<1x32xf32>
    tpu.vector_store %arg6[%c6_19, %c0_20], %26 {strides = array<i32>} : memref<8x32xf32, #tpu.memory_space<vmem>>, vector<1x32xf32>,
    %c7 = arith.constant 7 : index
    %28 = memref.load %arg0[%c7] : memref<8xi32, #tpu.memory_space<smem>>
    %29 = arith.index_cast %28 : i32 to index
    %c0_21 = arith.constant 0 : index
    %30 = vector.load %arg1[%29, %c0_21] : memref<50x32xf32, #tpu.memory_space<vmem>>, vector<1x32xf32>
    %c7_22 = arith.constant 7 : index
    %c0_23 = arith.constant 0 : index
    %31 = vector.load %arg6[%c7_22, %c0_23] : memref<8x32xf32, #tpu.memory_space<vmem>>, vector<1x32xf32>
    tpu.vector_store %arg6[%c7_22, %c0_23], %30 {strides = array<i32>} : memref<8x32xf32, #tpu.memory_space<vmem>>, vector<1x32xf32>,
    %c0_24 = arith.constant 0 : index
    %c0_25 = arith.constant 0 : index
    %32 = vector.load %arg6[%c0_24, %c0_25] : memref<8x32xf32, #tpu.memory_space<vmem>>, vector<8x32xf32>
    %c0_26 = arith.constant 0 : index
    %c0_27 = arith.constant 0 : index
    %33 = vector.load %arg2[%c0_26, %c0_27] : memref<8x32xf32, #tpu.memory_space<vmem>>, vector<8x32xf32>
    %34 = arith.addf %32, %33 : vector<8x32xf32>
    %c0_28 = arith.constant 0 : index
    %c0_29 = arith.constant 0 : index
    %35 = vector.load %arg3[%c0_28, %c0_29] : memref<160x128xf32, #tpu.memory_space<vmem>>, vector<32x128xf32>
    %c32 = arith.constant 32 : index
    %c0_30 = arith.constant 0 : index
    %36 = vector.load %arg3[%c32, %c0_30] : memref<160x128xf32, #tpu.memory_space<vmem>>, vector<1x128xf32>
    %c40 = arith.constant 40 : index
    %c0_31 = arith.constant 0 : index
    %37 = vector.load %arg3[%c40, %c0_31] : memref<160x128xf32, #tpu.memory_space<vmem>>, vector<32x128xf32>
    %c72 = arith.constant 72 : index
    %c0_32 = arith.constant 0 : index
    %38 = vector.load %arg3[%c72, %c0_32] : memref<160x128xf32, #tpu.memory_space<vmem>>, vector<1x128xf32>
    %c0_33 = arith.constant 0 : index
    %c0_34 = arith.constant 0 : index
    %39 = vector.load %arg4[%c0_33, %c0_34] : memref<376x32xf32, #tpu.memory_space<vmem>>, vector<32x32xf32>
    %c32_35 = arith.constant 32 : index
    %c0_36 = arith.constant 0 : index
    %40 = vector.load %arg4[%c32_35, %c0_36] : memref<376x32xf32, #tpu.memory_space<vmem>>, vector<128x32xf32>
    %c160 = arith.constant 160 : index
    %c0_37 = arith.constant 0 : index
    %41 = vector.load %arg4[%c160, %c0_37] : memref<376x32xf32, #tpu.memory_space<vmem>>, vector<1x32xf32>
    %c161 = arith.constant 161 : index
    %c0_38 = arith.constant 0 : index
    %42 = vector.load %arg4[%c161, %c0_38] : memref<376x32xf32, #tpu.memory_space<vmem>>, vector<1x32xf32>
    %c162 = arith.constant 162 : index
    %c0_39 = arith.constant 0 : index
    %43 = vector.load %arg4[%c162, %c0_39] : memref<376x32xf32, #tpu.memory_space<vmem>>, vector<1x32xf32>
    %c163 = arith.constant 163 : index
    %c0_40 = arith.constant 0 : index
    %44 = vector.load %arg4[%c163, %c0_40] : memref<376x32xf32, #tpu.memory_space<vmem>>, vector<1x32xf32>
    %c164 = arith.constant 164 : index
    %c0_41 = arith.constant 0 : index
    %45 = vector.load %arg4[%c164, %c0_41] : memref<376x32xf32, #tpu.memory_space<vmem>>, vector<1x32xf32>
    %c165 = arith.constant 165 : index
    %c0_42 = arith.constant 0 : index
    %46 = vector.load %arg4[%c165, %c0_42] : memref<376x32xf32, #tpu.memory_space<vmem>>, vector<1x32xf32>
    %cst = arith.constant dense<0.000000e+00> : vector<8x128xf32>
    %47 = tpu.matmul %34, %35, %cst {dimension_numbers = #tpu.dot_dimension_numbers<[1], [0], [0], [1], [0, 0, 1, 1], [], []>} : vector<8x32xf32>, vector<32x128xf32>, vector<8x128xf32> -> vector<8x128xf32>
    %48 = vector.broadcast %36 : vector<1x128xf32> to vector<8x128xf32>
    %49 = arith.addf %47, %48 : vector<8x128xf32>
    %cst_43 = arith.constant 0.000000e+00 : f32
    %50 = vector.broadcast %cst_43 : f32 to vector<8x32xf32>
    %51 = vector.broadcast %41 : vector<1x32xf32> to vector<8x32xf32>
    %52 = arith.addf %50, %51 : vector<8x32xf32>
    %53 = vector.extract_strided_slice %49 {offsets = [0, 0], sizes = [8, 8], strides = [1, 1]} : vector<8x128xf32> to vector<8x8xf32>
    %54 = vector.extract_strided_slice %49 {offsets = [0, 32], sizes = [8, 8], strides = [1, 1]} : vector<8x128xf32> to vector<8x8xf32>
    %55 = vector.extract_strided_slice %49 {offsets = [0, 64], sizes = [8, 8], strides = [1, 1]} : vector<8x128xf32> to vector<8x8xf32>
    %cst_44 = arith.constant dense<0.000000e+00> : vector<8x8xf32>
    %56 = tpu.matmul %53, %54, %cst_44 {dimension_numbers = #tpu.dot_dimension_numbers<[1], [1], [0], [0], [0, 0, 1, 0], [], []>} : vector<8x8xf32>, vector<8x8xf32>, vector<8x8xf32> -> vector<8x8xf32>
    %cst_45 = arith.constant dense<0xFF800000> : vector<8xf32>
    %57 = vector.multi_reduction <maximumf>, %56, %cst_45 [1] : vector<8x8xf32> to vector<8xf32>
    %58 = vector.shape_cast %57 : vector<8xf32> to vector<8x1xf32>
    %59 = vector.broadcast %58 : vector<8x1xf32> to vector<8x8xf32>
    %60 = arith.subf %56, %59 : vector<8x8xf32>
    %61 = math.exp %60 : vector<8x8xf32>
    %cst_46 = arith.constant dense<0.000000e+00> : vector<8xf32>
    %62 = vector.multi_reduction <add>, %61, %cst_46 [1] : vector<8x8xf32> to vector<8xf32>
    %63 = vector.shape_cast %62 : vector<8xf32> to vector<8x1xf32>
    %64 = tpu.reciprocal %63 {approx = true} : vector<8x1xf32> -> vector<8x1xf32>
    %65 = vector.broadcast %64 : vector<8x1xf32> to vector<8x8xf32>
    %66 = arith.mulf %61, %65 : vector<8x8xf32>
    %cst_47 = arith.constant dense<0.000000e+00> : vector<8x8xf32>
    %67 = tpu.matmul %66, %55, %cst_47 {dimension_numbers = #tpu.dot_dimension_numbers<[1], [0], [0], [1], [0, 0, 1, 1], [], []>} : vector<8x8xf32>, vector<8x8xf32>, vector<8x8xf32> -> vector<8x8xf32>
    %68 = vector.extract_strided_slice %39 {offsets = [0, 0], sizes = [8, 32], strides = [1, 1]} : vector<32x32xf32> to vector<8x32xf32>
    %cst_48 = arith.constant dense<0.000000e+00> : vector<8x32xf32>
    %69 = tpu.matmul %67, %68, %cst_48 {dimension_numbers = #tpu.dot_dimension_numbers<[1], [0], [0], [1], [0, 0, 1, 1], [], []>} : vector<8x8xf32>, vector<8x32xf32>, vector<8x32xf32> -> vector<8x32xf32>
    %70 = arith.addf %52, %69 : vector<8x32xf32>
    %71 = vector.extract_strided_slice %49 {offsets = [0, 8], sizes = [8, 8], strides = [1, 1]} : vector<8x128xf32> to vector<8x8xf32>
    %72 = vector.extract_strided_slice %49 {offsets = [0, 40], sizes = [8, 8], strides = [1, 1]} : vector<8x128xf32> to vector<8x8xf32>
    %73 = vector.extract_strided_slice %49 {offsets = [0, 72], sizes = [8, 8], strides = [1, 1]} : vector<8x128xf32> to vector<8x8xf32>
    %cst_49 = arith.constant dense<0.000000e+00> : vector<8x8xf32>
    %74 = tpu.matmul %71, %72, %cst_49 {dimension_numbers = #tpu.dot_dimension_numbers<[1], [1], [0], [0], [0, 0, 1, 0], [], []>} : vector<8x8xf32>, vector<8x8xf32>, vector<8x8xf32> -> vector<8x8xf32>
    %cst_50 = arith.constant dense<0xFF800000> : vector<8xf32>
    %75 = vector.multi_reduction <maximumf>, %74, %cst_50 [1] : vector<8x8xf32> to vector<8xf32>
    %76 = vector.shape_cast %75 : vector<8xf32> to vector<8x1xf32>
    %77 = vector.broadcast %76 : vector<8x1xf32> to vector<8x8xf32>
    %78 = arith.subf %74, %77 : vector<8x8xf32>
    %79 = math.exp %78 : vector<8x8xf32>
    %cst_51 = arith.constant dense<0.000000e+00> : vector<8xf32>
    %80 = vector.multi_reduction <add>, %79, %cst_51 [1] : vector<8x8xf32> to vector<8xf32>
    %81 = vector.shape_cast %80 : vector<8xf32> to vector<8x1xf32>
    %82 = tpu.reciprocal %81 {approx = true} : vector<8x1xf32> -> vector<8x1xf32>
    %83 = vector.broadcast %82 : vector<8x1xf32> to vector<8x8xf32>
    %84 = arith.mulf %79, %83 : vector<8x8xf32>
    %cst_52 = arith.constant dense<0.000000e+00> : vector<8x8xf32>
    %85 = tpu.matmul %84, %73, %cst_52 {dimension_numbers = #tpu.dot_dimension_numbers<[1], [0], [0], [1], [0, 0, 1, 1], [], []>} : vector<8x8xf32>, vector<8x8xf32>, vector<8x8xf32> -> vector<8x8xf32>
    %86 = vector.extract_strided_slice %39 {offsets = [8, 0], sizes = [8, 32], strides = [1, 1]} : vector<32x32xf32> to vector<8x32xf32>
    %cst_53 = arith.constant dense<0.000000e+00> : vector<8x32xf32>
    %87 = tpu.matmul %85, %86, %cst_53 {dimension_numbers = #tpu.dot_dimension_numbers<[1], [0], [0], [1], [0, 0, 1, 1], [], []>} : vector<8x8xf32>, vector<8x32xf32>, vector<8x32xf32> -> vector<8x32xf32>
    %88 = arith.addf %70, %87 : vector<8x32xf32>
    %89 = vector.extract_strided_slice %49 {offsets = [0, 16], sizes = [8, 8], strides = [1, 1]} : vector<8x128xf32> to vector<8x8xf32>
    %90 = vector.extract_strided_slice %49 {offsets = [0, 48], sizes = [8, 8], strides = [1, 1]} : vector<8x128xf32> to vector<8x8xf32>
    %91 = vector.extract_strided_slice %49 {offsets = [0, 80], sizes = [8, 8], strides = [1, 1]} : vector<8x128xf32> to vector<8x8xf32>
    %cst_54 = arith.constant dense<0.000000e+00> : vector<8x8xf32>
    %92 = tpu.matmul %89, %90, %cst_54 {dimension_numbers = #tpu.dot_dimension_numbers<[1], [1], [0], [0], [0, 0, 1, 0], [], []>} : vector<8x8xf32>, vector<8x8xf32>, vector<8x8xf32> -> vector<8x8xf32>
    %cst_55 = arith.constant dense<0xFF800000> : vector<8xf32>
    %93 = vector.multi_reduction <maximumf>, %92, %cst_55 [1] : vector<8x8xf32> to vector<8xf32>
    %94 = vector.shape_cast %93 : vector<8xf32> to vector<8x1xf32>
    %95 = vector.broadcast %94 : vector<8x1xf32> to vector<8x8xf32>
    %96 = arith.subf %92, %95 : vector<8x8xf32>
    %97 = math.exp %96 : vector<8x8xf32>
    %cst_56 = arith.constant dense<0.000000e+00> : vector<8xf32>
    %98 = vector.multi_reduction <add>, %97, %cst_56 [1] : vector<8x8xf32> to vector<8xf32>
    %99 = vector.shape_cast %98 : vector<8xf32> to vector<8x1xf32>
    %100 = tpu.reciprocal %99 {approx = true} : vector<8x1xf32> -> vector<8x1xf32>
    %101 = vector.broadcast %100 : vector<8x1xf32> to vector<8x8xf32>
    %102 = arith.mulf %97, %101 : vector<8x8xf32>
    %cst_57 = arith.constant dense<0.000000e+00> : vector<8x8xf32>
    %103 = tpu.matmul %102, %91, %cst_57 {dimension_numbers = #tpu.dot_dimension_numbers<[1], [0], [0], [1], [0, 0, 1, 1], [], []>} : vector<8x8xf32>, vector<8x8xf32>, vector<8x8xf32> -> vector<8x8xf32>
    %104 = vector.extract_strided_slice %39 {offsets = [16, 0], sizes = [8, 32], strides = [1, 1]} : vector<32x32xf32> to vector<8x32xf32>
    %cst_58 = arith.constant dense<0.000000e+00> : vector<8x32xf32>
    %105 = tpu.matmul %103, %104, %cst_58 {dimension_numbers = #tpu.dot_dimension_numbers<[1], [0], [0], [1], [0, 0, 1, 1], [], []>} : vector<8x8xf32>, vector<8x32xf32>, vector<8x32xf32> -> vector<8x32xf32>
    %106 = arith.addf %88, %105 : vector<8x32xf32>
    %107 = vector.extract_strided_slice %49 {offsets = [0, 24], sizes = [8, 8], strides = [1, 1]} : vector<8x128xf32> to vector<8x8xf32>
    %108 = vector.extract_strided_slice %49 {offsets = [0, 56], sizes = [8, 8], strides = [1, 1]} : vector<8x128xf32> to vector<8x8xf32>
    %109 = vector.extract_strided_slice %49 {offsets = [0, 88], sizes = [8, 8], strides = [1, 1]} : vector<8x128xf32> to vector<8x8xf32>
    %cst_59 = arith.constant dense<0.000000e+00> : vector<8x8xf32>
    %110 = tpu.matmul %107, %108, %cst_59 {dimension_numbers = #tpu.dot_dimension_numbers<[1], [1], [0], [0], [0, 0, 1, 0], [], []>} : vector<8x8xf32>, vector<8x8xf32>, vector<8x8xf32> -> vector<8x8xf32>
    %cst_60 = arith.constant dense<0xFF800000> : vector<8xf32>
    %111 = vector.multi_reduction <maximumf>, %110, %cst_60 [1] : vector<8x8xf32> to vector<8xf32>
    %112 = vector.shape_cast %111 : vector<8xf32> to vector<8x1xf32>
    %113 = vector.broadcast %112 : vector<8x1xf32> to vector<8x8xf32>
    %114 = arith.subf %110, %113 : vector<8x8xf32>
    %115 = math.exp %114 : vector<8x8xf32>
    %cst_61 = arith.constant dense<0.000000e+00> : vector<8xf32>
    %116 = vector.multi_reduction <add>, %115, %cst_61 [1] : vector<8x8xf32> to vector<8xf32>
    %117 = vector.shape_cast %116 : vector<8xf32> to vector<8x1xf32>
    %118 = tpu.reciprocal %117 {approx = true} : vector<8x1xf32> -> vector<8x1xf32>
    %119 = vector.broadcast %118 : vector<8x1xf32> to vector<8x8xf32>
    %120 = arith.mulf %115, %119 : vector<8x8xf32>
    %cst_62 = arith.constant dense<0.000000e+00> : vector<8x8xf32>
    %121 = tpu.matmul %120, %109, %cst_62 {dimension_numbers = #tpu.dot_dimension_numbers<[1], [0], [0], [1], [0, 0, 1, 1], [], []>} : vector<8x8xf32>, vector<8x8xf32>, vector<8x8xf32> -> vector<8x8xf32>
    %122 = vector.extract_strided_slice %39 {offsets = [24, 0], sizes = [8, 32], strides = [1, 1]} : vector<32x32xf32> to vector<8x32xf32>
    %cst_63 = arith.constant dense<0.000000e+00> : vector<8x32xf32>
    %123 = tpu.matmul %121, %122, %cst_63 {dimension_numbers = #tpu.dot_dimension_numbers<[1], [0], [0], [1], [0, 0, 1, 1], [], []>} : vector<8x8xf32>, vector<8x32xf32>, vector<8x32xf32> -> vector<8x32xf32>
    %124 = arith.addf %106, %123 : vector<8x32xf32>
    %125 = arith.addf %34, %124 : vector<8x32xf32>
    %cst_64 = arith.constant dense<0.000000e+00> : vector<8xf32>
    %126 = vector.multi_reduction <add>, %125, %cst_64 [1] : vector<8x32xf32> to vector<8xf32>
    %127 = vector.shape_cast %126 : vector<8xf32> to vector<8x1xf32>
    %cst_65 = arith.constant 3.200000e+01 : f32
    %128 = vector.broadcast %cst_65 : f32 to vector<8x1xf32>
    %129 = arith.divf %127, %128 : vector<8x1xf32>
    %130 = vector.broadcast %129 : vector<8x1xf32> to vector<8x32xf32>
    %131 = arith.subf %125, %130 : vector<8x32xf32>
    %132 = arith.mulf %131, %131 : vector<8x32xf32>
    %cst_66 = arith.constant dense<0.000000e+00> : vector<8xf32>
    %133 = vector.multi_reduction <add>, %132, %cst_66 [1] : vector<8x32xf32> to vector<8xf32>
    %134 = vector.shape_cast %133 : vector<8xf32> to vector<8x1xf32>
    %cst_67 = arith.constant 3.200000e+01 : f32
    %135 = vector.broadcast %cst_67 : f32 to vector<8x1xf32>
    %136 = arith.divf %134, %135 : vector<8x1xf32>
    %cst_68 = arith.constant 9.99999974E-6 : f32
    %137 = vector.broadcast %cst_68 : f32 to vector<8x1xf32>
    %138 = arith.addf %136, %137 : vector<8x1xf32>
    %139 = math.rsqrt %138 : vector<8x1xf32>
    %140 = vector.broadcast %139 : vector<8x1xf32> to vector<8x32xf32>
    %141 = arith.mulf %131, %140 : vector<8x32xf32>
    %142 = vector.broadcast %43 : vector<1x32xf32> to vector<8x32xf32>
    %143 = arith.mulf %141, %142 : vector<8x32xf32>
    %144 = vector.broadcast %44 : vector<1x32xf32> to vector<8x32xf32>
    %145 = arith.addf %143, %144 : vector<8x32xf32>
    %cst_69 = arith.constant dense<0.000000e+00> : vector<8x128xf32>
    %146 = tpu.matmul %145, %37, %cst_69 {dimension_numbers = #tpu.dot_dimension_numbers<[1], [0], [0], [1], [0, 0, 1, 1], [], []>} : vector<8x32xf32>, vector<32x128xf32>, vector<8x128xf32> -> vector<8x128xf32>
    %147 = vector.broadcast %38 : vector<1x128xf32> to vector<8x128xf32>
    %148 = arith.addf %146, %147 : vector<8x128xf32>
    %cst_70 = arith.constant 0.000000e+00 : f32
    %149 = vector.broadcast %cst_70 : f32 to vector<8x128xf32>
    %150 = arith.maximumf %148, %149 : vector<8x128xf32>
    %cst_71 = arith.constant dense<0.000000e+00> : vector<8x32xf32>
    %151 = tpu.matmul %150, %40, %cst_71 {dimension_numbers = #tpu.dot_dimension_numbers<[1], [0], [0], [1], [0, 0, 1, 1], [], []>} : vector<8x128xf32>, vector<128x32xf32>, vector<8x32xf32> -> vector<8x32xf32>
    %152 = vector.broadcast %42 : vector<1x32xf32> to vector<8x32xf32>
    %153 = arith.addf %151, %152 : vector<8x32xf32>
    %154 = arith.addf %145, %153 : vector<8x32xf32>
    %cst_72 = arith.constant dense<0.000000e+00> : vector<8xf32>
    %155 = vector.multi_reduction <add>, %154, %cst_72 [1] : vector<8x32xf32> to vector<8xf32>
    %156 = vector.shape_cast %155 : vector<8xf32> to vector<8x1xf32>
    %cst_73 = arith.constant 3.200000e+01 : f32
    %157 = vector.broadcast %cst_73 : f32 to vector<8x1xf32>
    %158 = arith.divf %156, %157 : vector<8x1xf32>
    %159 = vector.broadcast %158 : vector<8x1xf32> to vector<8x32xf32>
    %160 = arith.subf %154, %159 : vector<8x32xf32>
    %161 = arith.mulf %160, %160 : vector<8x32xf32>
    %cst_74 = arith.constant dense<0.000000e+00> : vector<8xf32>
    %162 = vector.multi_reduction <add>, %161, %cst_74 [1] : vector<8x32xf32> to vector<8xf32>
    %163 = vector.shape_cast %162 : vector<8xf32> to vector<8x1xf32>
    %cst_75 = arith.constant 3.200000e+01 : f32
    %164 = vector.broadcast %cst_75 : f32 to vector<8x1xf32>
    %165 = arith.divf %163, %164 : vector<8x1xf32>
    %cst_76 = arith.constant 9.99999974E-6 : f32
    %166 = vector.broadcast %cst_76 : f32 to vector<8x1xf32>
    %167 = arith.addf %165, %166 : vector<8x1xf32>
    %168 = math.rsqrt %167 : vector<8x1xf32>
    %169 = vector.broadcast %168 : vector<8x1xf32> to vector<8x32xf32>
    %170 = arith.mulf %160, %169 : vector<8x32xf32>
    %171 = vector.broadcast %45 : vector<1x32xf32> to vector<8x32xf32>
    %172 = arith.mulf %170, %171 : vector<8x32xf32>
    %173 = vector.broadcast %46 : vector<1x32xf32> to vector<8x32xf32>
    %174 = arith.addf %172, %173 : vector<8x32xf32>
    %c80 = arith.constant 80 : index
    %c0_77 = arith.constant 0 : index
    %175 = vector.load %arg3[%c80, %c0_77] : memref<160x128xf32, #tpu.memory_space<vmem>>, vector<32x128xf32>
    %c112 = arith.constant 112 : index
    %c0_78 = arith.constant 0 : index
    %176 = vector.load %arg3[%c112, %c0_78] : memref<160x128xf32, #tpu.memory_space<vmem>>, vector<1x128xf32>
    %c120 = arith.constant 120 : index
    %c0_79 = arith.constant 0 : index
    %177 = vector.load %arg3[%c120, %c0_79] : memref<160x128xf32, #tpu.memory_space<vmem>>, vector<32x128xf32>
    %c152 = arith.constant 152 : index
    %c0_80 = arith.constant 0 : index
    %178 = vector.load %arg3[%c152, %c0_80] : memref<160x128xf32, #tpu.memory_space<vmem>>, vector<1x128xf32>
    %c168 = arith.constant 168 : index
    %c0_81 = arith.constant 0 : index
    %179 = vector.load %arg4[%c168, %c0_81] : memref<376x32xf32, #tpu.memory_space<vmem>>, vector<32x32xf32>
    %c200 = arith.constant 200 : index
    %c0_82 = arith.constant 0 : index
    %180 = vector.load %arg4[%c200, %c0_82] : memref<376x32xf32, #tpu.memory_space<vmem>>, vector<128x32xf32>
    %c328 = arith.constant 328 : index
    %c0_83 = arith.constant 0 : index
    %181 = vector.load %arg4[%c328, %c0_83] : memref<376x32xf32, #tpu.memory_space<vmem>>, vector<1x32xf32>
    %c329 = arith.constant 329 : index
    %c0_84 = arith.constant 0 : index
    %182 = vector.load %arg4[%c329, %c0_84] : memref<376x32xf32, #tpu.memory_space<vmem>>, vector<1x32xf32>
    %c330 = arith.constant 330 : index
    %c0_85 = arith.constant 0 : index
    %183 = vector.load %arg4[%c330, %c0_85] : memref<376x32xf32, #tpu.memory_space<vmem>>, vector<1x32xf32>
    %c331 = arith.constant 331 : index
    %c0_86 = arith.constant 0 : index
    %184 = vector.load %arg4[%c331, %c0_86] : memref<376x32xf32, #tpu.memory_space<vmem>>, vector<1x32xf32>
    %c332 = arith.constant 332 : index
    %c0_87 = arith.constant 0 : index
    %185 = vector.load %arg4[%c332, %c0_87] : memref<376x32xf32, #tpu.memory_space<vmem>>, vector<1x32xf32>
    %c333 = arith.constant 333 : index
    %c0_88 = arith.constant 0 : index
    %186 = vector.load %arg4[%c333, %c0_88] : memref<376x32xf32, #tpu.memory_space<vmem>>, vector<1x32xf32>
    %cst_89 = arith.constant dense<0.000000e+00> : vector<8x128xf32>
    %187 = tpu.matmul %174, %175, %cst_89 {dimension_numbers = #tpu.dot_dimension_numbers<[1], [0], [0], [1], [0, 0, 1, 1], [], []>} : vector<8x32xf32>, vector<32x128xf32>, vector<8x128xf32> -> vector<8x128xf32>
    %188 = vector.broadcast %176 : vector<1x128xf32> to vector<8x128xf32>
    %189 = arith.addf %187, %188 : vector<8x128xf32>
    %cst_90 = arith.constant 0.000000e+00 : f32
    %190 = vector.broadcast %cst_90 : f32 to vector<8x32xf32>
    %191 = vector.broadcast %181 : vector<1x32xf32> to vector<8x32xf32>
    %192 = arith.addf %190, %191 : vector<8x32xf32>
    %193 = vector.extract_strided_slice %189 {offsets = [0, 0], sizes = [8, 8], strides = [1, 1]} : vector<8x128xf32> to vector<8x8xf32>
    %194 = vector.extract_strided_slice %189 {offsets = [0, 32], sizes = [8, 8], strides = [1, 1]} : vector<8x128xf32> to vector<8x8xf32>
    %195 = vector.extract_strided_slice %189 {offsets = [0, 64], sizes = [8, 8], strides = [1, 1]} : vector<8x128xf32> to vector<8x8xf32>
    %cst_91 = arith.constant dense<0.000000e+00> : vector<8x8xf32>
    %196 = tpu.matmul %193, %194, %cst_91 {dimension_numbers = #tpu.dot_dimension_numbers<[1], [1], [0], [0], [0, 0, 1, 0], [], []>} : vector<8x8xf32>, vector<8x8xf32>, vector<8x8xf32> -> vector<8x8xf32>
    %cst_92 = arith.constant dense<0xFF800000> : vector<8xf32>
    %197 = vector.multi_reduction <maximumf>, %196, %cst_92 [1] : vector<8x8xf32> to vector<8xf32>
    %198 = vector.shape_cast %197 : vector<8xf32> to vector<8x1xf32>
    %199 = vector.broadcast %198 : vector<8x1xf32> to vector<8x8xf32>
    %200 = arith.subf %196, %199 : vector<8x8xf32>
    %201 = math.exp %200 : vector<8x8xf32>
    %cst_93 = arith.constant dense<0.000000e+00> : vector<8xf32>
    %202 = vector.multi_reduction <add>, %201, %cst_93 [1] : vector<8x8xf32> to vector<8xf32>
    %203 = vector.shape_cast %202 : vector<8xf32> to vector<8x1xf32>
    %204 = tpu.reciprocal %203 {approx = true} : vector<8x1xf32> -> vector<8x1xf32>
    %205 = vector.broadcast %204 : vector<8x1xf32> to vector<8x8xf32>
    %206 = arith.mulf %201, %205 : vector<8x8xf32>
    %cst_94 = arith.constant dense<0.000000e+00> : vector<8x8xf32>
    %207 = tpu.matmul %206, %195, %cst_94 {dimension_numbers = #tpu.dot_dimension_numbers<[1], [0], [0], [1], [0, 0, 1, 1], [], []>} : vector<8x8xf32>, vector<8x8xf32>, vector<8x8xf32> -> vector<8x8xf32>
    %208 = vector.extract_strided_slice %179 {offsets = [0, 0], sizes = [8, 32], strides = [1, 1]} : vector<32x32xf32> to vector<8x32xf32>
    %cst_95 = arith.constant dense<0.000000e+00> : vector<8x32xf32>
    %209 = tpu.matmul %207, %208, %cst_95 {dimension_numbers = #tpu.dot_dimension_numbers<[1], [0], [0], [1], [0, 0, 1, 1], [], []>} : vector<8x8xf32>, vector<8x32xf32>, vector<8x32xf32> -> vector<8x32xf32>
    %210 = arith.addf %192, %209 : vector<8x32xf32>
    %211 = vector.extract_strided_slice %189 {offsets = [0, 8], sizes = [8, 8], strides = [1, 1]} : vector<8x128xf32> to vector<8x8xf32>
    %212 = vector.extract_strided_slice %189 {offsets = [0, 40], sizes = [8, 8], strides = [1, 1]} : vector<8x128xf32> to vector<8x8xf32>
    %213 = vector.extract_strided_slice %189 {offsets = [0, 72], sizes = [8, 8], strides = [1, 1]} : vector<8x128xf32> to vector<8x8xf32>
    %cst_96 = arith.constant dense<0.000000e+00> : vector<8x8xf32>
    %214 = tpu.matmul %211, %212, %cst_96 {dimension_numbers = #tpu.dot_dimension_numbers<[1], [1], [0], [0], [0, 0, 1, 0], [], []>} : vector<8x8xf32>, vector<8x8xf32>, vector<8x8xf32> -> vector<8x8xf32>
    %cst_97 = arith.constant dense<0xFF800000> : vector<8xf32>
    %215 = vector.multi_reduction <maximumf>, %214, %cst_97 [1] : vector<8x8xf32> to vector<8xf32>
    %216 = vector.shape_cast %215 : vector<8xf32> to vector<8x1xf32>
    %217 = vector.broadcast %216 : vector<8x1xf32> to vector<8x8xf32>
    %218 = arith.subf %214, %217 : vector<8x8xf32>
    %219 = math.exp %218 : vector<8x8xf32>
    %cst_98 = arith.constant dense<0.000000e+00> : vector<8xf32>
    %220 = vector.multi_reduction <add>, %219, %cst_98 [1] : vector<8x8xf32> to vector<8xf32>
    %221 = vector.shape_cast %220 : vector<8xf32> to vector<8x1xf32>
    %222 = tpu.reciprocal %221 {approx = true} : vector<8x1xf32> -> vector<8x1xf32>
    %223 = vector.broadcast %222 : vector<8x1xf32> to vector<8x8xf32>
    %224 = arith.mulf %219, %223 : vector<8x8xf32>
    %cst_99 = arith.constant dense<0.000000e+00> : vector<8x8xf32>
    %225 = tpu.matmul %224, %213, %cst_99 {dimension_numbers = #tpu.dot_dimension_numbers<[1], [0], [0], [1], [0, 0, 1, 1], [], []>} : vector<8x8xf32>, vector<8x8xf32>, vector<8x8xf32> -> vector<8x8xf32>
    %226 = vector.extract_strided_slice %179 {offsets = [8, 0], sizes = [8, 32], strides = [1, 1]} : vector<32x32xf32> to vector<8x32xf32>
    %cst_100 = arith.constant dense<0.000000e+00> : vector<8x32xf32>
    %227 = tpu.matmul %225, %226, %cst_100 {dimension_numbers = #tpu.dot_dimension_numbers<[1], [0], [0], [1], [0, 0, 1, 1], [], []>} : vector<8x8xf32>, vector<8x32xf32>, vector<8x32xf32> -> vector<8x32xf32>
    %228 = arith.addf %210, %227 : vector<8x32xf32>
    %229 = vector.extract_strided_slice %189 {offsets = [0, 16], sizes = [8, 8], strides = [1, 1]} : vector<8x128xf32> to vector<8x8xf32>
    %230 = vector.extract_strided_slice %189 {offsets = [0, 48], sizes = [8, 8], strides = [1, 1]} : vector<8x128xf32> to vector<8x8xf32>
    %231 = vector.extract_strided_slice %189 {offsets = [0, 80], sizes = [8, 8], strides = [1, 1]} : vector<8x128xf32> to vector<8x8xf32>
    %cst_101 = arith.constant dense<0.000000e+00> : vector<8x8xf32>
    %232 = tpu.matmul %229, %230, %cst_101 {dimension_numbers = #tpu.dot_dimension_numbers<[1], [1], [0], [0], [0, 0, 1, 0], [], []>} : vector<8x8xf32>, vector<8x8xf32>, vector<8x8xf32> -> vector<8x8xf32>
    %cst_102 = arith.constant dense<0xFF800000> : vector<8xf32>
    %233 = vector.multi_reduction <maximumf>, %232, %cst_102 [1] : vector<8x8xf32> to vector<8xf32>
    %234 = vector.shape_cast %233 : vector<8xf32> to vector<8x1xf32>
    %235 = vector.broadcast %234 : vector<8x1xf32> to vector<8x8xf32>
    %236 = arith.subf %232, %235 : vector<8x8xf32>
    %237 = math.exp %236 : vector<8x8xf32>
    %cst_103 = arith.constant dense<0.000000e+00> : vector<8xf32>
    %238 = vector.multi_reduction <add>, %237, %cst_103 [1] : vector<8x8xf32> to vector<8xf32>
    %239 = vector.shape_cast %238 : vector<8xf32> to vector<8x1xf32>
    %240 = tpu.reciprocal %239 {approx = true} : vector<8x1xf32> -> vector<8x1xf32>
    %241 = vector.broadcast %240 : vector<8x1xf32> to vector<8x8xf32>
    %242 = arith.mulf %237, %241 : vector<8x8xf32>
    %cst_104 = arith.constant dense<0.000000e+00> : vector<8x8xf32>
    %243 = tpu.matmul %242, %231, %cst_104 {dimension_numbers = #tpu.dot_dimension_numbers<[1], [0], [0], [1], [0, 0, 1, 1], [], []>} : vector<8x8xf32>, vector<8x8xf32>, vector<8x8xf32> -> vector<8x8xf32>
    %244 = vector.extract_strided_slice %179 {offsets = [16, 0], sizes = [8, 32], strides = [1, 1]} : vector<32x32xf32> to vector<8x32xf32>
    %cst_105 = arith.constant dense<0.000000e+00> : vector<8x32xf32>
    %245 = tpu.matmul %243, %244, %cst_105 {dimension_numbers = #tpu.dot_dimension_numbers<[1], [0], [0], [1], [0, 0, 1, 1], [], []>} : vector<8x8xf32>, vector<8x32xf32>, vector<8x32xf32> -> vector<8x32xf32>
    %246 = arith.addf %228, %245 : vector<8x32xf32>
    %247 = vector.extract_strided_slice %189 {offsets = [0, 24], sizes = [8, 8], strides = [1, 1]} : vector<8x128xf32> to vector<8x8xf32>
    %248 = vector.extract_strided_slice %189 {offsets = [0, 56], sizes = [8, 8], strides = [1, 1]} : vector<8x128xf32> to vector<8x8xf32>
    %249 = vector.extract_strided_slice %189 {offsets = [0, 88], sizes = [8, 8], strides = [1, 1]} : vector<8x128xf32> to vector<8x8xf32>
    %cst_106 = arith.constant dense<0.000000e+00> : vector<8x8xf32>
    %250 = tpu.matmul %247, %248, %cst_106 {dimension_numbers = #tpu.dot_dimension_numbers<[1], [1], [0], [0], [0, 0, 1, 0], [], []>} : vector<8x8xf32>, vector<8x8xf32>, vector<8x8xf32> -> vector<8x8xf32>
    %cst_107 = arith.constant dense<0xFF800000> : vector<8xf32>
    %251 = vector.multi_reduction <maximumf>, %250, %cst_107 [1] : vector<8x8xf32> to vector<8xf32>
    %252 = vector.shape_cast %251 : vector<8xf32> to vector<8x1xf32>
    %253 = vector.broadcast %252 : vector<8x1xf32> to vector<8x8xf32>
    %254 = arith.subf %250, %253 : vector<8x8xf32>
    %255 = math.exp %254 : vector<8x8xf32>
    %cst_108 = arith.constant dense<0.000000e+00> : vector<8xf32>
    %256 = vector.multi_reduction <add>, %255, %cst_108 [1] : vector<8x8xf32> to vector<8xf32>
    %257 = vector.shape_cast %256 : vector<8xf32> to vector<8x1xf32>
    %258 = tpu.reciprocal %257 {approx = true} : vector<8x1xf32> -> vector<8x1xf32>
    %259 = vector.broadcast %258 : vector<8x1xf32> to vector<8x8xf32>
    %260 = arith.mulf %255, %259 : vector<8x8xf32>
    %cst_109 = arith.constant dense<0.000000e+00> : vector<8x8xf32>
    %261 = tpu.matmul %260, %249, %cst_109 {dimension_numbers = #tpu.dot_dimension_numbers<[1], [0], [0], [1], [0, 0, 1, 1], [], []>} : vector<8x8xf32>, vector<8x8xf32>, vector<8x8xf32> -> vector<8x8xf32>
    %262 = vector.extract_strided_slice %179 {offsets = [24, 0], sizes = [8, 32], strides = [1, 1]} : vector<32x32xf32> to vector<8x32xf32>
    %cst_110 = arith.constant dense<0.000000e+00> : vector<8x32xf32>
    %263 = tpu.matmul %261, %262, %cst_110 {dimension_numbers = #tpu.dot_dimension_numbers<[1], [0], [0], [1], [0, 0, 1, 1], [], []>} : vector<8x8xf32>, vector<8x32xf32>, vector<8x32xf32> -> vector<8x32xf32>
    %264 = arith.addf %246, %263 : vector<8x32xf32>
    %265 = arith.addf %174, %264 : vector<8x32xf32>
    %cst_111 = arith.constant dense<0.000000e+00> : vector<8xf32>
    %266 = vector.multi_reduction <add>, %265, %cst_111 [1] : vector<8x32xf32> to vector<8xf32>
    %267 = vector.shape_cast %266 : vector<8xf32> to vector<8x1xf32>
    %cst_112 = arith.constant 3.200000e+01 : f32
    %268 = vector.broadcast %cst_112 : f32 to vector<8x1xf32>
    %269 = arith.divf %267, %268 : vector<8x1xf32>
    %270 = vector.broadcast %269 : vector<8x1xf32> to vector<8x32xf32>
    %271 = arith.subf %265, %270 : vector<8x32xf32>
    %272 = arith.mulf %271, %271 : vector<8x32xf32>
    %cst_113 = arith.constant dense<0.000000e+00> : vector<8xf32>
    %273 = vector.multi_reduction <add>, %272, %cst_113 [1] : vector<8x32xf32> to vector<8xf32>
    %274 = vector.shape_cast %273 : vector<8xf32> to vector<8x1xf32>
    %cst_114 = arith.constant 3.200000e+01 : f32
    %275 = vector.broadcast %cst_114 : f32 to vector<8x1xf32>
    %276 = arith.divf %274, %275 : vector<8x1xf32>
    %cst_115 = arith.constant 9.99999974E-6 : f32
    %277 = vector.broadcast %cst_115 : f32 to vector<8x1xf32>
    %278 = arith.addf %276, %277 : vector<8x1xf32>
    %279 = math.rsqrt %278 : vector<8x1xf32>
    %280 = vector.broadcast %279 : vector<8x1xf32> to vector<8x32xf32>
    %281 = arith.mulf %271, %280 : vector<8x32xf32>
    %282 = vector.broadcast %183 : vector<1x32xf32> to vector<8x32xf32>
    %283 = arith.mulf %281, %282 : vector<8x32xf32>
    %284 = vector.broadcast %184 : vector<1x32xf32> to vector<8x32xf32>
    %285 = arith.addf %283, %284 : vector<8x32xf32>
    %cst_116 = arith.constant dense<0.000000e+00> : vector<8x128xf32>
    %286 = tpu.matmul %285, %177, %cst_116 {dimension_numbers = #tpu.dot_dimension_numbers<[1], [0], [0], [1], [0, 0, 1, 1], [], []>} : vector<8x32xf32>, vector<32x128xf32>, vector<8x128xf32> -> vector<8x128xf32>
    %287 = vector.broadcast %178 : vector<1x128xf32> to vector<8x128xf32>
    %288 = arith.addf %286, %287 : vector<8x128xf32>
    %cst_117 = arith.constant 0.000000e+00 : f32
    %289 = vector.broadcast %cst_117 : f32 to vector<8x128xf32>
    %290 = arith.maximumf %288, %289 : vector<8x128xf32>
    %cst_118 = arith.constant dense<0.000000e+00> : vector<8x32xf32>
    %291 = tpu.matmul %290, %180, %cst_118 {dimension_numbers = #tpu.dot_dimension_numbers<[1], [0], [0], [1], [0, 0, 1, 1], [], []>} : vector<8x128xf32>, vector<128x32xf32>, vector<8x32xf32> -> vector<8x32xf32>
    %292 = vector.broadcast %182 : vector<1x32xf32> to vector<8x32xf32>
    %293 = arith.addf %291, %292 : vector<8x32xf32>
    %294 = arith.addf %285, %293 : vector<8x32xf32>
    %cst_119 = arith.constant dense<0.000000e+00> : vector<8xf32>
    %295 = vector.multi_reduction <add>, %294, %cst_119 [1] : vector<8x32xf32> to vector<8xf32>
    %296 = vector.shape_cast %295 : vector<8xf32> to vector<8x1xf32>
    %cst_120 = arith.constant 3.200000e+01 : f32
    %297 = vector.broadcast %cst_120 : f32 to vector<8x1xf32>
    %298 = arith.divf %296, %297 : vector<8x1xf32>
    %299 = vector.broadcast %298 : vector<8x1xf32> to vector<8x32xf32>
    %300 = arith.subf %294, %299 : vector<8x32xf32>
    %301 = arith.mulf %300, %300 : vector<8x32xf32>
    %cst_121 = arith.constant dense<0.000000e+00> : vector<8xf32>
    %302 = vector.multi_reduction <add>, %301, %cst_121 [1] : vector<8x32xf32> to vector<8xf32>
    %303 = vector.shape_cast %302 : vector<8xf32> to vector<8x1xf32>
    %cst_122 = arith.constant 3.200000e+01 : f32
    %304 = vector.broadcast %cst_122 : f32 to vector<8x1xf32>
    %305 = arith.divf %303, %304 : vector<8x1xf32>
    %cst_123 = arith.constant 9.99999974E-6 : f32
    %306 = vector.broadcast %cst_123 : f32 to vector<8x1xf32>
    %307 = arith.addf %305, %306 : vector<8x1xf32>
    %308 = math.rsqrt %307 : vector<8x1xf32>
    %309 = vector.broadcast %308 : vector<8x1xf32> to vector<8x32xf32>
    %310 = arith.mulf %300, %309 : vector<8x32xf32>
    %311 = vector.broadcast %185 : vector<1x32xf32> to vector<8x32xf32>
    %312 = arith.mulf %310, %311 : vector<8x32xf32>
    %313 = vector.broadcast %186 : vector<1x32xf32> to vector<8x32xf32>
    %314 = arith.addf %312, %313 : vector<8x32xf32>
    %c336 = arith.constant 336 : index
    %c0_124 = arith.constant 0 : index
    %315 = vector.load %arg4[%c336, %c0_124] : memref<376x32xf32, #tpu.memory_space<vmem>>, vector<32x32xf32>
    %c368 = arith.constant 368 : index
    %c0_125 = arith.constant 0 : index
    %316 = vector.load %arg4[%c368, %c0_125] : memref<376x32xf32, #tpu.memory_space<vmem>>, vector<1x32xf32>
    %cst_126 = arith.constant dense<0.000000e+00> : vector<32xf32>
    %317 = vector.multi_reduction <add>, %314, %cst_126 [0] : vector<8x32xf32> to vector<32xf32>
    %318 = vector.shape_cast %317 : vector<32xf32> to vector<1x32xf32>
    %cst_127 = arith.constant 8.000000e+00 : f32
    %319 = vector.broadcast %cst_127 : f32 to vector<1x32xf32>
    %320 = arith.divf %318, %319 : vector<1x32xf32>
    %cst_128 = arith.constant dense<0.000000e+00> : vector<1x32xf32>
    %321 = tpu.matmul %320, %315, %cst_128 {dimension_numbers = #tpu.dot_dimension_numbers<[1], [0], [0], [1], [0, 0, 1, 1], [], []>} : vector<1x32xf32>, vector<32x32xf32>, vector<1x32xf32> -> vector<1x32xf32>
    %322 = arith.addf %321, %316 : vector<1x32xf32>
    %323 = vector.extract_strided_slice %314 {offsets = [7, 0], sizes = [1, 32], strides = [1, 1]} : vector<8x32xf32> to vector<1x32xf32>
    %c0_129 = arith.constant 0 : index
    %c0_130 = arith.constant 0 : index
    %324 = vector.load %arg5[%c0_129, %c0_130] : memref<2x32xf32, #tpu.memory_space<vmem>>, vector<1x32xf32>
    tpu.vector_store %arg5[%c0_129, %c0_130], %323 {strides = array<i32>} : memref<2x32xf32, #tpu.memory_space<vmem>>, vector<1x32xf32>,
    %c1_131 = arith.constant 1 : index
    %c0_132 = arith.constant 0 : index
    %325 = vector.load %arg5[%c1_131, %c0_132] : memref<2x32xf32, #tpu.memory_space<vmem>>, vector<1x32xf32>
    tpu.vector_store %arg5[%c1_131, %c0_132], %322 {strides = array<i32>} : memref<2x32xf32, #tpu.memory_space<vmem>>, vector<1x32xf32>,
    return
  }
}

</mosaic_0001>

<llo_original>
// kernel: transformer_encoder_forward.1
$region0: #{transformer_encoder_forward.1}
  #allocation0 [shape = 'u32[]', space=smem, size = 0x4, offset = 0x4, fixed_abs, tag = 'smem constant byte address 0x4 - core index']
  #allocation1 [shape = 'u32[72,128]{1,0:T(1,128)}', space=vmem, size = 0x9000, scoped, tag = 'internal scratch']
  #allocation2 [shape = 'f32[8,32]{1,0:T(8,128)}', space=vmem, size = 0x1000, scoped, tag = 'scratch operand']
  %s0 = inlined_call_operand.vmem [shape: s32[8], index: 0, kind: input, shape index: {}]
  %s1 = inlined_call_operand.vmem [shape: f32[50,32], index: 1, kind: input, shape index: {}]
  %s2 = inlined_call_operand.vmem [shape: f32[8,32], index: 2, kind: input, shape index: {}]
  %s3 = inlined_call_operand.vmem [shape: f32[160,128], index: 3, kind: input, shape index: {}]
  %s4 = inlined_call_operand.vmem [shape: f32[376,32], index: 4, kind: input, shape index: {}]
  %s5 = inlined_call_operand.vmem [shape: f32[2,32], index: 5, kind: output, shape index: {}]
  %s6 = sld [smem:[#allocation0]]
  $region34: #{transformer_encoder_forward.1} parent=0
    _
  %s8 = ssub.s32 1, %s6
  %s9 = scalar_select 0, %s8, %s6
  $region1: #{transformer_encoder_forward.1} parent=0
    #allocation3 [shape = 'u8[512]{0}', space=smem, size = 0x200, scoped, tag = 'input window, operand 0, single buffered']
    #allocation4 [shape = 's32[1]{0}', space=sflag, size = 0x4, scoped, tag = 'scoped memory for transformer_encoder_forward.1']
    %10 = vsyncpa [#allocation4], 0
    // Predicated region
    $region2: #{transformer_encoder_forward.1} parent=1 // pred_check
      _
    $region3: #{transformer_encoder_forward.1} parent=1 // pred_check_branch
      %12 = sbr.rel (0) target = $region5
    $region4: #{transformer_encoder_forward.1} parent=1 // pred_region
      %14 = vsyncadd [#allocation4], 0
      %s16 = sshll.u32 %s0, 4
      %s17 = int_to_ptr.vmem [resolvable:$true] %s16
      %19 = dma.vmem_to_smem %s17, 16, [#allocation3], [#allocation4]
    $region5: #{transformer_encoder_forward.1} parent=1 // pred_fallthru
      _
    // Predicated region
    $region6: #{transformer_encoder_forward.1} parent=1 // pred_check
      _
    $region7: #{transformer_encoder_forward.1} parent=1 // pred_check_branch
      %21 = sbr.rel (0) target = $region9
    $region8: #{transformer_encoder_forward.1} parent=1 // pred_region
      _
    $region9: #{transformer_encoder_forward.1} parent=1 // pred_fallthru
      _
    // Predicated region
    $region10: #{transformer_encoder_forward.1} parent=1 // pred_check
      _
    $region11: #{transformer_encoder_forward.1} parent=1 // pred_check_branch
      %23 = sbr.rel (0) target = $region13
    $region12: #{transformer_encoder_forward.1} parent=1 // pred_region
      _
    $region13: #{transformer_encoder_forward.1} parent=1 // pred_fallthru
      _
    // Predicated region
    $region14: #{transformer_encoder_forward.1} parent=1 // pred_check
      _
    $region15: #{transformer_encoder_forward.1} parent=1 // pred_check_branch
      %25 = sbr.rel (0) target = $region17
    $region16: #{transformer_encoder_forward.1} parent=1 // pred_region
      _
    $region17: #{transformer_encoder_forward.1} parent=1 // pred_fallthru
      _
    // Predicated region
    $region18: #{transformer_encoder_forward.1} parent=1 // pred_check
      _
    $region19: #{transformer_encoder_forward.1} parent=1 // pred_check_branch
      %27 = sbr.rel (0) target = $region21
    $region20: #{transformer_encoder_forward.1} parent=1 // pred_region
      _
    $region21: #{transformer_encoder_forward.1} parent=1 // pred_fallthru
      _
    // Predicated region
    $region22: #{transformer_encoder_forward.1} parent=1 // pred_check
      _
    $region23: #{transformer_encoder_forward.1} parent=1 // pred_check_branch
      %29 = sbr.rel (0) target = $region25
    $region24: #{transformer_encoder_forward.1} parent=1 // pred_region
      %31 = dma.done [#allocation4], 16
    $region25: #{transformer_encoder_forward.1} parent=1 // pred_fallthru
      _
    %32 = sfence
    %s33 = sld [smem:[#allocation3]]
    %s34 = scalar_lea.vmem %s1, %s33
    %v35 = vld [vmem:[%s34] sm:$0x1]
    %vm36 = vcmask 253952
    %37 = vst.msk [vmem:[#allocation2] sm:$0x1] %vm36, %v35
    %s38 = sld [smem:[#allocation3 + $0x1]]
    %s39 = scalar_lea.vmem %s1, %s38
    %v40 = vld [vmem:[%s39] sm:$0x1]
    %41 = vst.msk [vmem:[#allocation2 + $0x1] sm:$0x1] %vm36, %v40
    %s42 = sld [smem:[#allocation3 + $0x2]]
    %s43 = scalar_lea.vmem %s1, %s42
    %v44 = vld [vmem:[%s43] sm:$0x1]
    %45 = vst.msk [vmem:[#allocation2 + $0x2] sm:$0x1] %vm36, %v44
    %s46 = sld [smem:[#allocation3 + $0x3]]
    %s47 = scalar_lea.vmem %s1, %s46
    %v48 = vld [vmem:[%s47] sm:$0x1]
    %49 = vst.msk [vmem:[#allocation2 + $0x3] sm:$0x1] %vm36, %v48
    %s50 = sld [smem:[#allocation3 + $0x4]]
    %s51 = scalar_lea.vmem %s1, %s50
    %v52 = vld [vmem:[%s51] sm:$0x1]
    %53 = vst.msk [vmem:[#allocation2 + $0x4] sm:$0x1] %vm36, %v52
    %s54 = sld [smem:[#allocation3 + $0x5]]
    %s55 = scalar_lea.vmem %s1, %s54
    %v56 = vld [vmem:[%s55] sm:$0x1]
    %57 = vst.msk [vmem:[#allocation2 + $0x5] sm:$0x1] %vm36, %v56
    %s58 = sld [smem:[#allocation3 + $0x6]]
    %s59 = scalar_lea.vmem %s1, %s58
    %v60 = vld [vmem:[%s59] sm:$0x1]
    %61 = vst.msk [vmem:[#allocation2 + $0x6] sm:$0x1] %vm36, %v60
    %s62 = sld [smem:[#allocation3 + $0x7]]
    %s63 = scalar_lea.vmem %s1, %s62
    %v64 = vld [vmem:[%s63] sm:$0x1]
    %65 = vst.msk [vmem:[#allocation2 + $0x7] sm:$0x1] %vm36, %v64
    %v66 = vld [vmem:[#allocation2] sm:$0xff]
    %v67 = vld [vmem:[%s2] sm:$0xff]
    %v68 = vadd.f32 %v66, %v67
    %v69 = vld [vmem:[%s3] sm:$0xff]
    %v70 = vld [vmem:[%s3 + $0x8] sm:$0xff]
    %v71 = vld [vmem:[%s3 + $0x10] sm:$0xff]
    %v72 = vld [vmem:[%s3 + $0x18] sm:$0xff]
    %v73 = vld [vmem:[%s3 + $0x20] sm:$0x1]
    %v74 = vld [vmem:[%s3 + $0x28] sm:$0xff]
    %v75 = vld [vmem:[%s3 + $0x30] sm:$0xff]
    %v76 = vld [vmem:[%s3 + $0x38] sm:$0xff]
    %v77 = vld [vmem:[%s3 + $0x40] sm:$0xff]
    %v78 = vld [vmem:[%s3 + $0x48] sm:$0x1]
    %v79 = vld [vmem:[%s4] sm:$0xff]
    %v80 = vld [vmem:[%s4 + $0x8] sm:$0xff]
    %v81 = vld [vmem:[%s4 + $0x10] sm:$0xff]
    %v82 = vld [vmem:[%s4 + $0x18] sm:$0xff]
    %v83 = vld [vmem:[%s4 + $0x20] sm:$0xff]
    %v84 = vld [vmem:[%s4 + $0x28] sm:$0xff]
    %v85 = vld [vmem:[%s4 + $0x30] sm:$0xff]
    %v86 = vld [vmem:[%s4 + $0x38] sm:$0xff]
    %v87 = vld [vmem:[%s4 + $0x40] sm:$0xff]
    %v88 = vld [vmem:[%s4 + $0x48] sm:$0xff]
    %v89 = vld [vmem:[%s4 + $0x50] sm:$0xff]
    %v90 = vld [vmem:[%s4 + $0x58] sm:$0xff]
    %v91 = vld [vmem:[%s4 + $0x60] sm:$0xff]
    %v92 = vld [vmem:[%s4 + $0x68] sm:$0xff]
    %v93 = vld [vmem:[%s4 + $0x70] sm:$0xff]
    %v94 = vld [vmem:[%s4 + $0x78] sm:$0xff]
    %v95 = vld [vmem:[%s4 + $0x80] sm:$0xff]
    %v96 = vld [vmem:[%s4 + $0x88] sm:$0xff]
    %v97 = vld [vmem:[%s4 + $0x90] sm:$0xff]
    %v98 = vld [vmem:[%s4 + $0x98] sm:$0xff]
    %v99 = vld [vmem:[%s4 + $0xa0] sm:$0x1]
    %v100 = vld [vmem:[%s4 + $0xa1] sm:$0x1]
    %v101 = vld [vmem:[%s4 + $0xa2] sm:$0x1]
    %v102 = vld [vmem:[%s4 + $0xa3] sm:$0x1]
    %v103 = vld [vmem:[%s4 + $0xa4] sm:$0x1]
    %v104 = vld [vmem:[%s4 + $0xa5] sm:$0x1]
    %v105 = vperm.slane %v73, 0
    %vm106 = vcmask 261120
    %v108 = vsel %vm106, %v68, 0
    %110 = vmatpush.msra.mxu0 0.0
    %111 = vmatpush.msra.mxu0 0.0
    %112 = vmatpush.msra.mxu0 0.0
    %113 = vmatpush.msra.mxu0 0.0
    %114 = vmatpush.msra.mxu0 0.0
    %115 = vmatpush.msra.mxu0 0.0
    %116 = vmatpush.msra.mxu0 0.0
    %117 = vmatpush.msra.mxu0 0.0
    %118 = vmatpush.msra.mxu0 0.0
    %119 = vmatpush.msra.mxu0 0.0
    %120 = vmatpush.msra.mxu0 0.0
    %121 = vmatpush.msra.mxu0 0.0
    %122 = vmatpush.msra.mxu0 %v72
    %123 = vmatpush.msra.mxu0 %v71
    %124 = vmatpush.msra.mxu0 %v70
    %125 = vmatpush.msra.mxu0 %v69
    %126 = vmatmul.f32.gmra.mxu0 %v108
    %v127 = vpop.f32.mrf.mxu0
    %v128 = vadd.f32 %v105, %v127
    %129 = vdwg.mxu0
    %v130 = vperm.slane %v99, 0
    %v131 = vadd.f32 %v130, 0.0
    %133 = vrot.lane.b32.xlu0 %v128, 96
    %v134 = vpop.permute.xlu0 %133
    %vm135 = vcmask 64512
    %v136 = vsel %vm135, %v128, 0
    %v138 = vsel %vm135, %v134, 0
    %140 = vmatpush.xpose.msra.mxu0 0.0
    %141 = vmatpush.xpose.msra.mxu0 0.0
    %142 = vmatpush.xpose.msra.mxu0 0.0
    %143 = vmatpush.xpose.msra.mxu0 0.0
    %144 = vmatpush.xpose.msra.mxu0 0.0
    %145 = vmatpush.xpose.msra.mxu0 0.0
    %146 = vmatpush.xpose.msra.mxu0 0.0
    %147 = vmatpush.xpose.msra.mxu0 0.0
    %148 = vmatpush.xpose.msra.mxu0 0.0
    %149 = vmatpush.xpose.msra.mxu0 0.0
    %150 = vmatpush.xpose.msra.mxu0 0.0
    %151 = vmatpush.xpose.msra.mxu0 0.0
    %152 = vmatpush.xpose.msra.mxu0 0.0
    %153 = vmatpush.xpose.msra.mxu0 0.0
    %154 = vmatpush.xpose.msra.mxu0 0.0
    %155 = vmatpush.xpose.msra.mxu0 %v138
    %156 = vmatmul.f32.gmra.mxu0 %v136
    %v157 = vpop.f32.mrf.mxu0
    %v158 = vadd.f32 0.0, %v157
    %159 = vdwg.mxu0
    %v160 = vsel %vm135, %v158, -inf
    %161 = vmax.xlane.f32.xlu0 %v160
    %v162 = vpop.xlane.xlu0 %161
    %v163 = vsub.f32 %v158, %v162
    %v164 = vmul.f32 %v163, 1.442695
    %v165 = vpow.pop %v164
    %v166 = vsel %vm135, %v165, 0.0
    %167 = vadd.xlane.f32.xlu0 %v166
    %v168 = vpop.xlane.xlu0 %167
    %v169 = vrcp.pop %v168
    %v170 = vmul.f32 %v165, %v169
    %171 = vrot.lane.b32.xlu0 %v128, 64
    %v172 = vpop.permute.xlu0 %171
    %v175 = vsel %vm135, %v170, 0
    %177 = vmatpush.msra.mxu0 0.0
    %178 = vmatpush.msra.mxu0 0.0
    %179 = vmatpush.msra.mxu0 0.0
    %180 = vmatpush.msra.mxu0 0.0
    %181 = vmatpush.msra.mxu0 0.0
    %182 = vmatpush.msra.mxu0 0.0
    %183 = vmatpush.msra.mxu0 0.0
    %184 = vmatpush.msra.mxu0 0.0
    %185 = vmatpush.msra.mxu0 0.0
    %186 = vmatpush.msra.mxu0 0.0
    %187 = vmatpush.msra.mxu0 0.0
    %188 = vmatpush.msra.mxu0 0.0
    %189 = vmatpush.msra.mxu0 0.0
    %190 = vmatpush.msra.mxu0 0.0
    %191 = vmatpush.msra.mxu0 0.0
    %192 = vmatpush.msra.mxu0 %v172
    %193 = vmatmul.f32.gmra.mxu0 %v175
    %v194 = vpop.f32.mrf.mxu0
    %v195 = vadd.f32 0.0, %v194
    %196 = vdwg.mxu0
    %v198 = vsel %vm135, %v195, 0
    %200 = vmatpush.msra.mxu0 0.0
    %201 = vmatpush.msra.mxu0 0.0
    %202 = vmatpush.msra.mxu0 0.0
    %203 = vmatpush.msra.mxu0 0.0
    %204 = vmatpush.msra.mxu0 0.0
    %205 = vmatpush.msra.mxu0 0.0
    %206 = vmatpush.msra.mxu0 0.0
    %207 = vmatpush.msra.mxu0 0.0
    %208 = vmatpush.msra.mxu0 0.0
    %209 = vmatpush.msra.mxu0 0.0
    %210 = vmatpush.msra.mxu0 0.0
    %211 = vmatpush.msra.mxu0 0.0
    %212 = vmatpush.msra.mxu0 0.0
    %213 = vmatpush.msra.mxu0 0.0
    %214 = vmatpush.msra.mxu0 0.0
    %215 = vmatpush.msra.mxu0 %v79
    %216 = vmatmul.f32.gmra.mxu0 %v198
    %v217 = vpop.f32.mrf.mxu0
    %v218 = vadd.f32 0.0, %v217
    %219 = vdwg.mxu0
    %v220 = vadd.f32 %v131, %v218
    %221 = vrot.lane.b32.xlu0 %v128, 120
    %v222 = vpop.permute.xlu0 %221
    %223 = vrot.lane.b32.xlu0 %v128, 88
    %v224 = vpop.permute.xlu0 %223
    %v225 = vsel %vm135, %v222, 0
    %v227 = vsel %vm135, %v224, 0
    %229 = vmatpush.xpose.msra.mxu0 0.0
    %230 = vmatpush.xpose.msra.mxu0 0.0
    %231 = vmatpush.xpose.msra.mxu0 0.0
    %232 = vmatpush.xpose.msra.mxu0 0.0
    %233 = vmatpush.xpose.msra.mxu0 0.0
    %234 = vmatpush.xpose.msra.mxu0 0.0
    %235 = vmatpush.xpose.msra.mxu0 0.0
    %236 = vmatpush.xpose.msra.mxu0 0.0
    %237 = vmatpush.xpose.msra.mxu0 0.0
    %238 = vmatpush.xpose.msra.mxu0 0.0
    %239 = vmatpush.xpose.msra.mxu0 0.0
    %240 = vmatpush.xpose.msra.mxu0 0.0
    %241 = vmatpush.xpose.msra.mxu0 0.0
    %242 = vmatpush.xpose.msra.mxu0 0.0
    %243 = vmatpush.xpose.msra.mxu0 0.0
    %244 = vmatpush.xpose.msra.mxu0 %v227
    %245 = vmatmul.f32.gmra.mxu0 %v225
    %v246 = vpop.f32.mrf.mxu0
    %v247 = vadd.f32 0.0, %v246
    %248 = vdwg.mxu0
    %v249 = vsel %vm135, %v247, -inf
    %250 = vmax.xlane.f32.xlu0 %v249
    %v251 = vpop.xlane.xlu0 %250
    %v252 = vsub.f32 %v247, %v251
    %v253 = vmul.f32 %v252, 1.442695
    %v254 = vpow.pop %v253
    %v255 = vsel %vm135, %v254, 0.0
    %256 = vadd.xlane.f32.xlu0 %v255
    %v257 = vpop.xlane.xlu0 %256
    %v258 = vrcp.pop %v257
    %v259 = vmul.f32 %v254, %v258
    %260 = vrot.lane.b32.xlu0 %v128, 56
    %v261 = vpop.permute.xlu0 %260
    %v264 = vsel %vm135, %v259, 0
    %266 = vmatpush.msra.mxu0 0.0
    %267 = vmatpush.msra.mxu0 0.0
    %268 = vmatpush.msra.mxu0 0.0
    %269 = vmatpush.msra.mxu0 0.0
    %270 = vmatpush.msra.mxu0 0.0
    %271 = vmatpush.msra.mxu0 0.0
    %272 = vmatpush.msra.mxu0 0.0
    %273 = vmatpush.msra.mxu0 0.0
    %274 = vmatpush.msra.mxu0 0.0
    %275 = vmatpush.msra.mxu0 0.0
    %276 = vmatpush.msra.mxu0 0.0
    %277 = vmatpush.msra.mxu0 0.0
    %278 = vmatpush.msra.mxu0 0.0
    %279 = vmatpush.msra.mxu0 0.0
    %280 = vmatpush.msra.mxu0 0.0
    %281 = vmatpush.msra.mxu0 %v261
    %282 = vmatmul.f32.gmra.mxu0 %v264
    %v283 = vpop.f32.mrf.mxu0
    %v284 = vadd.f32 0.0, %v283
    %285 = vdwg.mxu0
    %v287 = vsel %vm135, %v284, 0
    %289 = vmatpush.msra.mxu0 0.0
    %290 = vmatpush.msra.mxu0 0.0
    %291 = vmatpush.msra.mxu0 0.0
    %292 = vmatpush.msra.mxu0 0.0
    %293 = vmatpush.msra.mxu0 0.0
    %294 = vmatpush.msra.mxu0 0.0
    %295 = vmatpush.msra.mxu0 0.0
    %296 = vmatpush.msra.mxu0 0.0
    %297 = vmatpush.msra.mxu0 0.0
    %298 = vmatpush.msra.mxu0 0.0
    %299 = vmatpush.msra.mxu0 0.0
    %300 = vmatpush.msra.mxu0 0.0
    %301 = vmatpush.msra.mxu0 0.0
    %302 = vmatpush.msra.mxu0 0.0
    %303 = vmatpush.msra.mxu0 0.0
    %304 = vmatpush.msra.mxu0 %v80
    %305 = vmatmul.f32.gmra.mxu0 %v287
    %v306 = vpop.f32.mrf.mxu0
    %v307 = vadd.f32 0.0, %v306
    %308 = vdwg.mxu0
    %v309 = vadd.f32 %v220, %v307
    %310 = vrot.lane.b32.xlu0 %v128, 112
    %v311 = vpop.permute.xlu0 %310
    %312 = vrot.lane.b32.xlu0 %v128, 80
    %v313 = vpop.permute.xlu0 %312
    %v314 = vsel %vm135, %v311, 0
    %v316 = vsel %vm135, %v313, 0
    %318 = vmatpush.xpose.msra.mxu0 0.0
    %319 = vmatpush.xpose.msra.mxu0 0.0
    %320 = vmatpush.xpose.msra.mxu0 0.0
    %321 = vmatpush.xpose.msra.mxu0 0.0
    %322 = vmatpush.xpose.msra.mxu0 0.0
    %323 = vmatpush.xpose.msra.mxu0 0.0
    %324 = vmatpush.xpose.msra.mxu0 0.0
    %325 = vmatpush.xpose.msra.mxu0 0.0
    %326 = vmatpush.xpose.msra.mxu0 0.0
    %327 = vmatpush.xpose.msra.mxu0 0.0
    %328 = vmatpush.xpose.msra.mxu0 0.0
    %329 = vmatpush.xpose.msra.mxu0 0.0
    %330 = vmatpush.xpose.msra.mxu0 0.0
    %331 = vmatpush.xpose.msra.mxu0 0.0
    %332 = vmatpush.xpose.msra.mxu0 0.0
    %333 = vmatpush.xpose.msra.mxu0 %v316
    %334 = vmatmul.f32.gmra.mxu0 %v314
    %v335 = vpop.f32.mrf.mxu0
    %v336 = vadd.f32 0.0, %v335
    %337 = vdwg.mxu0
    %v338 = vsel %vm135, %v336, -inf
    %339 = vmax.xlane.f32.xlu0 %v338
    %v340 = vpop.xlane.xlu0 %339
    %v341 = vsub.f32 %v336, %v340
    %v342 = vmul.f32 %v341, 1.442695
    %v343 = vpow.pop %v342
    %v344 = vsel %vm135, %v343, 0.0
    %345 = vadd.xlane.f32.xlu0 %v344
    %v346 = vpop.xlane.xlu0 %345
    %v347 = vrcp.pop %v346
    %v348 = vmul.f32 %v343, %v347
    %349 = vrot.lane.b32.xlu0 %v128, 48
    %v350 = vpop.permute.xlu0 %349
    %v353 = vsel %vm135, %v348, 0
    %355 = vmatpush.msra.mxu0 0.0
    %356 = vmatpush.msra.mxu0 0.0
    %357 = vmatpush.msra.mxu0 0.0
    %358 = vmatpush.msra.mxu0 0.0
    %359 = vmatpush.msra.mxu0 0.0
    %360 = vmatpush.msra.mxu0 0.0
    %361 = vmatpush.msra.mxu0 0.0
    %362 = vmatpush.msra.mxu0 0.0
    %363 = vmatpush.msra.mxu0 0.0
    %364 = vmatpush.msra.mxu0 0.0
    %365 = vmatpush.msra.mxu0 0.0
    %366 = vmatpush.msra.mxu0 0.0
    %367 = vmatpush.msra.mxu0 0.0
    %368 = vmatpush.msra.mxu0 0.0
    %369 = vmatpush.msra.mxu0 0.0
    %370 = vmatpush.msra.mxu0 %v350
    %371 = vmatmul.f32.gmra.mxu0 %v353
    %v372 = vpop.f32.mrf.mxu0
    %v373 = vadd.f32 0.0, %v372
    %374 = vdwg.mxu0
    %v376 = vsel %vm135, %v373, 0
    %378 = vmatpush.msra.mxu0 0.0
    %379 = vmatpush.msra.mxu0 0.0
    %380 = vmatpush.msra.mxu0 0.0
    %381 = vmatpush.msra.mxu0 0.0
    %382 = vmatpush.msra.mxu0 0.0
    %383 = vmatpush.msra.mxu0 0.0
    %384 = vmatpush.msra.mxu0 0.0
    %385 = vmatpush.msra.mxu0 0.0
    %386 = vmatpush.msra.mxu0 0.0
    %387 = vmatpush.msra.mxu0 0.0
    %388 = vmatpush.msra.mxu0 0.0
    %389 = vmatpush.msra.mxu0 0.0
    %390 = vmatpush.msra.mxu0 0.0
    %391 = vmatpush.msra.mxu0 0.0
    %392 = vmatpush.msra.mxu0 0.0
    %393 = vmatpush.msra.mxu0 %v81
    %394 = vmatmul.f32.gmra.mxu0 %v376
    %v395 = vpop.f32.mrf.mxu0
    %v396 = vadd.f32 0.0, %v395
    %397 = vdwg.mxu0
    %v398 = vadd.f32 %v309, %v396
    %399 = vrot.lane.b32.xlu0 %v128, 104
    %v400 = vpop.permute.xlu0 %399
    %401 = vrot.lane.b32.xlu0 %v128, 72
    %v402 = vpop.permute.xlu0 %401
    %v403 = vsel %vm135, %v400, 0
    %v405 = vsel %vm135, %v402, 0
    %407 = vmatpush.xpose.msra.mxu0 0.0
    %408 = vmatpush.xpose.msra.mxu0 0.0
    %409 = vmatpush.xpose.msra.mxu0 0.0
    %410 = vmatpush.xpose.msra.mxu0 0.0
    %411 = vmatpush.xpose.msra.mxu0 0.0
    %412 = vmatpush.xpose.msra.mxu0 0.0
    %413 = vmatpush.xpose.msra.mxu0 0.0
    %414 = vmatpush.xpose.msra.mxu0 0.0
    %415 = vmatpush.xpose.msra.mxu0 0.0
    %416 = vmatpush.xpose.msra.mxu0 0.0
    %417 = vmatpush.xpose.msra.mxu0 0.0
    %418 = vmatpush.xpose.msra.mxu0 0.0
    %419 = vmatpush.xpose.msra.mxu0 0.0
    %420 = vmatpush.xpose.msra.mxu0 0.0
    %421 = vmatpush.xpose.msra.mxu0 0.0
    %422 = vmatpush.xpose.msra.mxu0 %v405
    %423 = vmatmul.f32.gmra.mxu0 %v403
    %v424 = vpop.f32.mrf.mxu0
    %v425 = vadd.f32 0.0, %v424
    %426 = vdwg.mxu0
    %v427 = vsel %vm135, %v425, -inf
    %428 = vmax.xlane.f32.xlu0 %v427
    %v429 = vpop.xlane.xlu0 %428
    %v430 = vsub.f32 %v425, %v429
    %v431 = vmul.f32 %v430, 1.442695
    %v432 = vpow.pop %v431
    %v433 = vsel %vm135, %v432, 0.0
    %434 = vadd.xlane.f32.xlu0 %v433
    %v435 = vpop.xlane.xlu0 %434
    %v436 = vrcp.pop %v435
    %v437 = vmul.f32 %v432, %v436
    %438 = vrot.lane.b32.xlu0 %v128, 40
    %v439 = vpop.permute.xlu0 %438
    %v442 = vsel %vm135, %v437, 0
    %444 = vmatpush.msra.mxu0 0.0
    %445 = vmatpush.msra.mxu0 0.0
    %446 = vmatpush.msra.mxu0 0.0
    %447 = vmatpush.msra.mxu0 0.0
    %448 = vmatpush.msra.mxu0 0.0
    %449 = vmatpush.msra.mxu0 0.0
    %450 = vmatpush.msra.mxu0 0.0
    %451 = vmatpush.msra.mxu0 0.0
    %452 = vmatpush.msra.mxu0 0.0
    %453 = vmatpush.msra.mxu0 0.0
    %454 = vmatpush.msra.mxu0 0.0
    %455 = vmatpush.msra.mxu0 0.0
    %456 = vmatpush.msra.mxu0 0.0
    %457 = vmatpush.msra.mxu0 0.0
    %458 = vmatpush.msra.mxu0 0.0
    %459 = vmatpush.msra.mxu0 %v439
    %460 = vmatmul.f32.gmra.mxu0 %v442
    %v461 = vpop.f32.mrf.mxu0
    %v462 = vadd.f32 0.0, %v461
    %463 = vdwg.mxu0
    %v465 = vsel %vm135, %v462, 0
    %467 = vmatpush.msra.mxu0 0.0
    %468 = vmatpush.msra.mxu0 0.0
    %469 = vmatpush.msra.mxu0 0.0
    %470 = vmatpush.msra.mxu0 0.0
    %471 = vmatpush.msra.mxu0 0.0
    %472 = vmatpush.msra.mxu0 0.0
    %473 = vmatpush.msra.mxu0 0.0
    %474 = vmatpush.msra.mxu0 0.0
    %475 = vmatpush.msra.mxu0 0.0
    %476 = vmatpush.msra.mxu0 0.0
    %477 = vmatpush.msra.mxu0 0.0
    %478 = vmatpush.msra.mxu0 0.0
    %479 = vmatpush.msra.mxu0 0.0
    %480 = vmatpush.msra.mxu0 0.0
    %481 = vmatpush.msra.mxu0 0.0
    %482 = vmatpush.msra.mxu0 %v82
    %483 = vmatmul.f32.gmra.mxu0 %v465
    %v484 = vpop.f32.mrf.mxu0
    %v485 = vadd.f32 0.0, %v484
    %486 = vdwg.mxu0
    %v487 = vadd.f32 %v398, %v485
    %v488 = vadd.f32 %v68, %v487
    %v489 = vsel %vm106, %v488, 0.0
    %490 = vadd.xlane.f32.xlu0 %v489
    %v491 = vpop.xlane.xlu0 %490
    %v492 = vrcp.pop 32.0
    %v493 = vmul.f32 32.0, %v492
    %v494 = vsub.f32 1.0, %v493
    %v495 = vmul.f32 %v492, %v494
    %v496 = vadd.f32 %v492, %v495
    %vm497 = vweird.f32 %v492
    %v498 = vsel %vm497, %v492, %v496
    %v499 = vmul.f32 %v491, %v498
    %v500 = vsub.f32 %v488, %v499
    %v501 = vmul.f32 %v500, %v500
    %v502 = vsel %vm106, %v501, 0.0
    %503 = vadd.xlane.f32.xlu0 %v502
    %v504 = vpop.xlane.xlu0 %503
    %v505 = vmul.f32 %v504, %v498
    %v506 = vadd.f32 %v505, 1e-05
    %v507 = vrsqrt.pop %v506
    %v508 = vmul.f32 %v507, %v506
    %v509 = vmul.f32 %v508, %v507
    %v510 = vmul.f32 0.5, %v509
    %v511 = vsub.f32 1.5, %v510
    %v512 = vmul.f32 %v507, %v511
    %vm513 = vweird.f32 %v506
    %vm514 = vweird.f32 %v507
    %vm515 = vmor %vm513, %vm514
    %v516 = vsel %vm515, %v507, %v512
    %v517 = vmul.f32 %v500, %v516
    %v518 = vperm.slane %v101, 0
    %v519 = vmul.f32 %v517, %v518
    %v520 = vperm.slane %v102, 0
    %v521 = vadd.f32 %v519, %v520
    %v522 = vperm.slane %v78, 0
    %v524 = vsel %vm106, %v521, 0
    %526 = vmatpush.msra.mxu0 0.0
    %527 = vmatpush.msra.mxu0 0.0
    %528 = vmatpush.msra.mxu0 0.0
    %529 = vmatpush.msra.mxu0 0.0
    %530 = vmatpush.msra.mxu0 0.0
    %531 = vmatpush.msra.mxu0 0.0
    %532 = vmatpush.msra.mxu0 0.0
    %533 = vmatpush.msra.mxu0 0.0
    %534 = vmatpush.msra.mxu0 0.0
    %535 = vmatpush.msra.mxu0 0.0
    %536 = vmatpush.msra.mxu0 0.0
    %537 = vmatpush.msra.mxu0 0.0
    %538 = vmatpush.msra.mxu0 %v77
    %539 = vmatpush.msra.mxu0 %v76
    %540 = vmatpush.msra.mxu0 %v75
    %541 = vmatpush.msra.mxu0 %v74
    %542 = vmatmul.f32.gmra.mxu0 %v524
    %v543 = vpop.f32.mrf.mxu0
    %v544 = vadd.f32 %v522, %v543
    %545 = vdwg.mxu0
    %v546 = vmax.f32 %v544, 0.0
    %v547 = vperm.slane %v100, 0
    %548 = vmatpush.msra.mxu0 %v98
    %549 = vmatpush.msra.mxu0 %v97
    %550 = vmatpush.msra.mxu0 %v96
    %551 = vmatpush.msra.mxu0 %v95
    %552 = vmatpush.msra.mxu0 %v94
    %553 = vmatpush.msra.mxu0 %v93
    %554 = vmatpush.msra.mxu0 %v92
    %555 = vmatpush.msra.mxu0 %v91
    %556 = vmatpush.msra.mxu0 %v90
    %557 = vmatpush.msra.mxu0 %v89
    %558 = vmatpush.msra.mxu0 %v88
    %559 = vmatpush.msra.mxu0 %v87
    %560 = vmatpush.msra.mxu0 %v86
    %561 = vmatpush.msra.mxu0 %v85
    %562 = vmatpush.msra.mxu0 %v84
    %563 = vmatpush.msra.mxu0 %v83
    %564 = vmatmul.f32.gmra.mxu0 %v546
    %v565 = vpop.f32.mrf.mxu0
    %v566 = vadd.f32 %v547, %v565
    %567 = vdwg.mxu0
    %v568 = vadd.f32 %v521, %v566
    %v569 = vsel %vm106, %v568, 0.0
    %570 = vadd.xlane.f32.xlu0 %v569
    %v571 = vpop.xlane.xlu0 %570
    %v572 = vmul.f32 %v571, %v498
    %v573 = vsub.f32 %v568, %v572
    %v574 = vmul.f32 %v573, %v573
    %v575 = vsel %vm106, %v574, 0.0
    %576 = vadd.xlane.f32.xlu0 %v575
    %v577 = vpop.xlane.xlu0 %576
    %v578 = vmul.f32 %v577, %v498
    %v579 = vadd.f32 %v578, 1e-05
    %v580 = vrsqrt.pop %v579
    %v581 = vmul.f32 %v580, %v579
    %v582 = vmul.f32 %v581, %v580
    %v583 = vmul.f32 0.5, %v582
    %v584 = vsub.f32 1.5, %v583
    %v585 = vmul.f32 %v580, %v584
    %vm586 = vweird.f32 %v579
    %vm587 = vweird.f32 %v580
    %vm588 = vmor %vm586, %vm587
    %v589 = vsel %vm588, %v580, %v585
    %v590 = vmul.f32 %v573, %v589
    %v591 = vperm.slane %v103, 0
    %v592 = vmul.f32 %v590, %v591
    %v593 = vperm.slane %v104, 0
    %v594 = vadd.f32 %v592, %v593
    %v595 = vld [vmem:[%s3 + $0x50] sm:$0xff]
    %v596 = vld [vmem:[%s3 + $0x58] sm:$0xff]
    %v597 = vld [vmem:[%s3 + $0x60] sm:$0xff]
    %v598 = vld [vmem:[%s3 + $0x68] sm:$0xff]
    %v599 = vld [vmem:[%s3 + $0x70] sm:$0x1]
    %v600 = vld [vmem:[%s3 + $0x78] sm:$0xff]
    %v601 = vld [vmem:[%s3 + $0x80] sm:$0xff]
    %v602 = vld [vmem:[%s3 + $0x88] sm:$0xff]
    %v603 = vld [vmem:[%s3 + $0x90] sm:$0xff]
    %v604 = vld [vmem:[%s3 + $0x98] sm:$0x1]
    %v605 = vld [vmem:[%s4 + $0xa8] sm:$0xff]
    %v606 = vld [vmem:[%s4 + $0xb0] sm:$0xff]
    %v607 = vld [vmem:[%s4 + $0xb8] sm:$0xff]
    %v608 = vld [vmem:[%s4 + $0xc0] sm:$0xff]
    %v609 = vld [vmem:[%s4 + $0xc8] sm:$0xff]
    %v610 = vld [vmem:[%s4 + $0xd0] sm:$0xff]
    %v611 = vld [vmem:[%s4 + $0xd8] sm:$0xff]
    %v612 = vld [vmem:[%s4 + $0xe0] sm:$0xff]
    %v613 = vld [vmem:[%s4 + $0xe8] sm:$0xff]
    %v614 = vld [vmem:[%s4 + $0xf0] sm:$0xff]
    %v615 = vld [vmem:[%s4 + $0xf8] sm:$0xff]
    %v616 = vld [vmem:[%s4 + $0x100] sm:$0xff]
    %v617 = vld [vmem:[%s4 + $0x108] sm:$0xff]
    %v618 = vld [vmem:[%s4 + $0x110] sm:$0xff]
    %v619 = vld [vmem:[%s4 + $0x118] sm:$0xff]
    %v620 = vld [vmem:[%s4 + $0x120] sm:$0xff]
    %v621 = vld [vmem:[%s4 + $0x128] sm:$0xff]
    %v622 = vld [vmem:[%s4 + $0x130] sm:$0xff]
    %v623 = vld [vmem:[%s4 + $0x138] sm:$0xff]
    %v624 = vld [vmem:[%s4 + $0x140] sm:$0xff]
    %v625 = vld [vmem:[%s4 + $0x148] sm:$0x1]
    %v626 = vld [vmem:[%s4 + $0x149] sm:$0x1]
    %v627 = vld [vmem:[%s4 + $0x14a] sm:$0x1]
    %v628 = vld [vmem:[%s4 + $0x14b] sm:$0x1]
    %v629 = vld [vmem:[%s4 + $0x14c] sm:$0x1]
    %v630 = vld [vmem:[%s4 + $0x14d] sm:$0x1]
    %v631 = vperm.slane %v599, 0
    %v633 = vsel %vm106, %v594, 0
    %635 = vmatpush.msra.mxu0 0.0
    %636 = vmatpush.msra.mxu0 0.0
    %637 = vmatpush.msra.mxu0 0.0
    %638 = vmatpush.msra.mxu0 0.0
    %639 = vmatpush.msra.mxu0 0.0
    %640 = vmatpush.msra.mxu0 0.0
    %641 = vmatpush.msra.mxu0 0.0
    %642 = vmatpush.msra.mxu0 0.0
    %643 = vmatpush.msra.mxu0 0.0
    %644 = vmatpush.msra.mxu0 0.0
    %645 = vmatpush.msra.mxu0 0.0
    %646 = vmatpush.msra.mxu0 0.0
    %647 = vmatpush.msra.mxu0 %v598
    %648 = vmatpush.msra.mxu0 %v597
    %649 = vmatpush.msra.mxu0 %v596
    %650 = vmatpush.msra.mxu0 %v595
    %651 = vmatmul.f32.gmra.mxu0 %v633
    %v652 = vpop.f32.mrf.mxu0
    %v653 = vadd.f32 %v631, %v652
    %654 = vdwg.mxu0
    %v655 = vperm.slane %v625, 0
    %v656 = vadd.f32 %v655, 0.0
    %658 = vrot.lane.b32.xlu0 %v653, 96
    %v659 = vpop.permute.xlu0 %658
    %v660 = vsel %vm135, %v653, 0
    %v662 = vsel %vm135, %v659, 0
    %664 = vmatpush.xpose.msra.mxu0 0.0
    %665 = vmatpush.xpose.msra.mxu0 0.0
    %666 = vmatpush.xpose.msra.mxu0 0.0
    %667 = vmatpush.xpose.msra.mxu0 0.0
    %668 = vmatpush.xpose.msra.mxu0 0.0
    %669 = vmatpush.xpose.msra.mxu0 0.0
    %670 = vmatpush.xpose.msra.mxu0 0.0
    %671 = vmatpush.xpose.msra.mxu0 0.0
    %672 = vmatpush.xpose.msra.mxu0 0.0
    %673 = vmatpush.xpose.msra.mxu0 0.0
    %674 = vmatpush.xpose.msra.mxu0 0.0
    %675 = vmatpush.xpose.msra.mxu0 0.0
    %676 = vmatpush.xpose.msra.mxu0 0.0
    %677 = vmatpush.xpose.msra.mxu0 0.0
    %678 = vmatpush.xpose.msra.mxu0 0.0
    %679 = vmatpush.xpose.msra.mxu0 %v662
    %680 = vmatmul.f32.gmra.mxu0 %v660
    %v681 = vpop.f32.mrf.mxu0
    %v682 = vadd.f32 0.0, %v681
    %683 = vdwg.mxu0
    %v684 = vsel %vm135, %v682, -inf
    %685 = vmax.xlane.f32.xlu0 %v684
    %v686 = vpop.xlane.xlu0 %685
    %v687 = vsub.f32 %v682, %v686
    %v688 = vmul.f32 %v687, 1.442695
    %v689 = vpow.pop %v688
    %v690 = vsel %vm135, %v689, 0.0
    %691 = vadd.xlane.f32.xlu0 %v690
    %v692 = vpop.xlane.xlu0 %691
    %v693 = vrcp.pop %v692
    %v694 = vmul.f32 %v689, %v693
    %695 = vrot.lane.b32.xlu0 %v653, 64
    %v696 = vpop.permute.xlu0 %695
    %v699 = vsel %vm135, %v694, 0
    %701 = vmatpush.msra.mxu0 0.0
    %702 = vmatpush.msra.mxu0 0.0
    %703 = vmatpush.msra.mxu0 0.0
    %704 = vmatpush.msra.mxu0 0.0
    %705 = vmatpush.msra.mxu0 0.0
    %706 = vmatpush.msra.mxu0 0.0
    %707 = vmatpush.msra.mxu0 0.0
    %708 = vmatpush.msra.mxu0 0.0
    %709 = vmatpush.msra.mxu0 0.0
    %710 = vmatpush.msra.mxu0 0.0
    %711 = vmatpush.msra.mxu0 0.0
    %712 = vmatpush.msra.mxu0 0.0
    %713 = vmatpush.msra.mxu0 0.0
    %714 = vmatpush.msra.mxu0 0.0
    %715 = vmatpush.msra.mxu0 0.0
    %716 = vmatpush.msra.mxu0 %v696
    %717 = vmatmul.f32.gmra.mxu0 %v699
    %v718 = vpop.f32.mrf.mxu0
    %v719 = vadd.f32 0.0, %v718
    %720 = vdwg.mxu0
    %v722 = vsel %vm135, %v719, 0
    %724 = vmatpush.msra.mxu0 0.0
    %725 = vmatpush.msra.mxu0 0.0
    %726 = vmatpush.msra.mxu0 0.0
    %727 = vmatpush.msra.mxu0 0.0
    %728 = vmatpush.msra.mxu0 0.0
    %729 = vmatpush.msra.mxu0 0.0
    %730 = vmatpush.msra.mxu0 0.0
    %731 = vmatpush.msra.mxu0 0.0
    %732 = vmatpush.msra.mxu0 0.0
    %733 = vmatpush.msra.mxu0 0.0
    %734 = vmatpush.msra.mxu0 0.0
    %735 = vmatpush.msra.mxu0 0.0
    %736 = vmatpush.msra.mxu0 0.0
    %737 = vmatpush.msra.mxu0 0.0
    %738 = vmatpush.msra.mxu0 0.0
    %739 = vmatpush.msra.mxu0 %v605
    %740 = vmatmul.f32.gmra.mxu0 %v722
    %v741 = vpop.f32.mrf.mxu0
    %v742 = vadd.f32 0.0, %v741
    %743 = vdwg.mxu0
    %v744 = vadd.f32 %v656, %v742
    %745 = vrot.lane.b32.xlu0 %v653, 120
    %v746 = vpop.permute.xlu0 %745
    %747 = vrot.lane.b32.xlu0 %v653, 88
    %v748 = vpop.permute.xlu0 %747
    %v749 = vsel %vm135, %v746, 0
    %v751 = vsel %vm135, %v748, 0
    %753 = vmatpush.xpose.msra.mxu0 0.0
    %754 = vmatpush.xpose.msra.mxu0 0.0
    %755 = vmatpush.xpose.msra.mxu0 0.0
    %756 = vmatpush.xpose.msra.mxu0 0.0
    %757 = vmatpush.xpose.msra.mxu0 0.0
    %758 = vmatpush.xpose.msra.mxu0 0.0
    %759 = vmatpush.xpose.msra.mxu0 0.0
    %760 = vmatpush.xpose.msra.mxu0 0.0
    %761 = vmatpush.xpose.msra.mxu0 0.0
    %762 = vmatpush.xpose.msra.mxu0 0.0
    %763 = vmatpush.xpose.msra.mxu0 0.0
    %764 = vmatpush.xpose.msra.mxu0 0.0
    %765 = vmatpush.xpose.msra.mxu0 0.0
    %766 = vmatpush.xpose.msra.mxu0 0.0
    %767 = vmatpush.xpose.msra.mxu0 0.0
    %768 = vmatpush.xpose.msra.mxu0 %v751
    %769 = vmatmul.f32.gmra.mxu0 %v749
    %v770 = vpop.f32.mrf.mxu0
    %v771 = vadd.f32 0.0, %v770
    %772 = vdwg.mxu0
    %v773 = vsel %vm135, %v771, -inf
    %774 = vmax.xlane.f32.xlu0 %v773
    %v775 = vpop.xlane.xlu0 %774
    %v776 = vsub.f32 %v771, %v775
    %v777 = vmul.f32 %v776, 1.442695
    %v778 = vpow.pop %v777
    %v779 = vsel %vm135, %v778, 0.0
    %780 = vadd.xlane.f32.xlu0 %v779
    %v781 = vpop.xlane.xlu0 %780
    %v782 = vrcp.pop %v781
    %v783 = vmul.f32 %v778, %v782
    %784 = vrot.lane.b32.xlu0 %v653, 56
    %v785 = vpop.permute.xlu0 %784
    %v788 = vsel %vm135, %v783, 0
    %790 = vmatpush.msra.mxu0 0.0
    %791 = vmatpush.msra.mxu0 0.0
    %792 = vmatpush.msra.mxu0 0.0
    %793 = vmatpush.msra.mxu0 0.0
    %794 = vmatpush.msra.mxu0 0.0
    %795 = vmatpush.msra.mxu0 0.0
    %796 = vmatpush.msra.mxu0 0.0
    %797 = vmatpush.msra.mxu0 0.0
    %798 = vmatpush.msra.mxu0 0.0
    %799 = vmatpush.msra.mxu0 0.0
    %800 = vmatpush.msra.mxu0 0.0
    %801 = vmatpush.msra.mxu0 0.0
    %802 = vmatpush.msra.mxu0 0.0
    %803 = vmatpush.msra.mxu0 0.0
    %804 = vmatpush.msra.mxu0 0.0
    %805 = vmatpush.msra.mxu0 %v785
    %806 = vmatmul.f32.gmra.mxu0 %v788
    %v807 = vpop.f32.mrf.mxu0
    %v808 = vadd.f32 0.0, %v807
    %809 = vdwg.mxu0
    %v811 = vsel %vm135, %v808, 0
    %813 = vmatpush.msra.mxu0 0.0
    %814 = vmatpush.msra.mxu0 0.0
    %815 = vmatpush.msra.mxu0 0.0
    %816 = vmatpush.msra.mxu0 0.0
    %817 = vmatpush.msra.mxu0 0.0
    %818 = vmatpush.msra.mxu0 0.0
    %819 = vmatpush.msra.mxu0 0.0
    %820 = vmatpush.msra.mxu0 0.0
    %821 = vmatpush.msra.mxu0 0.0
    %822 = vmatpush.msra.mxu0 0.0
    %823 = vmatpush.msra.mxu0 0.0
    %824 = vmatpush.msra.mxu0 0.0
    %825 = vmatpush.msra.mxu0 0.0
    %826 = vmatpush.msra.mxu0 0.0
    %827 = vmatpush.msra.mxu0 0.0
    %828 = vmatpush.msra.mxu0 %v606
    %829 = vmatmul.f32.gmra.mxu0 %v811
    %v830 = vpop.f32.mrf.mxu0
    %v831 = vadd.f32 0.0, %v830
    %832 = vdwg.mxu0
    %v833 = vadd.f32 %v744, %v831
    %834 = vrot.lane.b32.xlu0 %v653, 112
    %v835 = vpop.permute.xlu0 %834
    %836 = vrot.lane.b32.xlu0 %v653, 80
    %v837 = vpop.permute.xlu0 %836
    %v838 = vsel %vm135, %v835, 0
    %v840 = vsel %vm135, %v837, 0
    %842 = vmatpush.xpose.msra.mxu0 0.0
    %843 = vmatpush.xpose.msra.mxu0 0.0
    %844 = vmatpush.xpose.msra.mxu0 0.0
    %845 = vmatpush.xpose.msra.mxu0 0.0
    %846 = vmatpush.xpose.msra.mxu0 0.0
    %847 = vmatpush.xpose.msra.mxu0 0.0
    %848 = vmatpush.xpose.msra.mxu0 0.0
    %849 = vmatpush.xpose.msra.mxu0 0.0
    %850 = vmatpush.xpose.msra.mxu0 0.0
    %851 = vmatpush.xpose.msra.mxu0 0.0
    %852 = vmatpush.xpose.msra.mxu0 0.0
    %853 = vmatpush.xpose.msra.mxu0 0.0
    %854 = vmatpush.xpose.msra.mxu0 0.0
    %855 = vmatpush.xpose.msra.mxu0 0.0
    %856 = vmatpush.xpose.msra.mxu0 0.0
    %857 = vmatpush.xpose.msra.mxu0 %v840
    %858 = vmatmul.f32.gmra.mxu0 %v838
    %v859 = vpop.f32.mrf.mxu0
    %v860 = vadd.f32 0.0, %v859
    %861 = vdwg.mxu0
    %v862 = vsel %vm135, %v860, -inf
    %863 = vmax.xlane.f32.xlu0 %v862
    %v864 = vpop.xlane.xlu0 %863
    %v865 = vsub.f32 %v860, %v864
    %v866 = vmul.f32 %v865, 1.442695
    %v867 = vpow.pop %v866
    %v868 = vsel %vm135, %v867, 0.0
    %869 = vadd.xlane.f32.xlu0 %v868
    %v870 = vpop.xlane.xlu0 %869
    %v871 = vrcp.pop %v870
    %v872 = vmul.f32 %v867, %v871
    %873 = vrot.lane.b32.xlu0 %v653, 48
    %v874 = vpop.permute.xlu0 %873
    %v877 = vsel %vm135, %v872, 0
    %879 = vmatpush.msra.mxu0 0.0
    %880 = vmatpush.msra.mxu0 0.0
    %881 = vmatpush.msra.mxu0 0.0
    %882 = vmatpush.msra.mxu0 0.0
    %883 = vmatpush.msra.mxu0 0.0
    %884 = vmatpush.msra.mxu0 0.0
    %885 = vmatpush.msra.mxu0 0.0
    %886 = vmatpush.msra.mxu0 0.0
    %887 = vmatpush.msra.mxu0 0.0
    %888 = vmatpush.msra.mxu0 0.0
    %889 = vmatpush.msra.mxu0 0.0
    %890 = vmatpush.msra.mxu0 0.0
    %891 = vmatpush.msra.mxu0 0.0
    %892 = vmatpush.msra.mxu0 0.0
    %893 = vmatpush.msra.mxu0 0.0
    %894 = vmatpush.msra.mxu0 %v874
    %895 = vmatmul.f32.gmra.mxu0 %v877
    %v896 = vpop.f32.mrf.mxu0
    %v897 = vadd.f32 0.0, %v896
    %898 = vdwg.mxu0
    %v900 = vsel %vm135, %v897, 0
    %902 = vmatpush.msra.mxu0 0.0
    %903 = vmatpush.msra.mxu0 0.0
    %904 = vmatpush.msra.mxu0 0.0
    %905 = vmatpush.msra.mxu0 0.0
    %906 = vmatpush.msra.mxu0 0.0
    %907 = vmatpush.msra.mxu0 0.0
    %908 = vmatpush.msra.mxu0 0.0
    %909 = vmatpush.msra.mxu0 0.0
    %910 = vmatpush.msra.mxu0 0.0
    %911 = vmatpush.msra.mxu0 0.0
    %912 = vmatpush.msra.mxu0 0.0
    %913 = vmatpush.msra.mxu0 0.0
    %914 = vmatpush.msra.mxu0 0.0
    %915 = vmatpush.msra.mxu0 0.0
    %916 = vmatpush.msra.mxu0 0.0
    %917 = vmatpush.msra.mxu0 %v607
    %918 = vmatmul.f32.gmra.mxu0 %v900
    %v919 = vpop.f32.mrf.mxu0
    %v920 = vadd.f32 0.0, %v919
    %921 = vdwg.mxu0
    %v922 = vadd.f32 %v833, %v920
    %923 = vrot.lane.b32.xlu0 %v653, 104
    %v924 = vpop.permute.xlu0 %923
    %925 = vrot.lane.b32.xlu0 %v653, 72
    %v926 = vpop.permute.xlu0 %925
    %v927 = vsel %vm135, %v924, 0
    %v929 = vsel %vm135, %v926, 0
    %931 = vmatpush.xpose.msra.mxu0 0.0
    %932 = vmatpush.xpose.msra.mxu0 0.0
    %933 = vmatpush.xpose.msra.mxu0 0.0
    %934 = vmatpush.xpose.msra.mxu0 0.0
    %935 = vmatpush.xpose.msra.mxu0 0.0
    %936 = vmatpush.xpose.msra.mxu0 0.0
    %937 = vmatpush.xpose.msra.mxu0 0.0
    %938 = vmatpush.xpose.msra.mxu0 0.0
    %939 = vmatpush.xpose.msra.mxu0 0.0
    %940 = vmatpush.xpose.msra.mxu0 0.0
    %941 = vmatpush.xpose.msra.mxu0 0.0
    %942 = vmatpush.xpose.msra.mxu0 0.0
    %943 = vmatpush.xpose.msra.mxu0 0.0
    %944 = vmatpush.xpose.msra.mxu0 0.0
    %945 = vmatpush.xpose.msra.mxu0 0.0
    %946 = vmatpush.xpose.msra.mxu0 %v929
    %947 = vmatmul.f32.gmra.mxu0 %v927
    %v948 = vpop.f32.mrf.mxu0
    %v949 = vadd.f32 0.0, %v948
    %950 = vdwg.mxu0
    %v951 = vsel %vm135, %v949, -inf
    %952 = vmax.xlane.f32.xlu0 %v951
    %v953 = vpop.xlane.xlu0 %952
    %v954 = vsub.f32 %v949, %v953
    %v955 = vmul.f32 %v954, 1.442695
    %v956 = vpow.pop %v955
    %v957 = vsel %vm135, %v956, 0.0
    %958 = vadd.xlane.f32.xlu0 %v957
    %v959 = vpop.xlane.xlu0 %958
    %v960 = vrcp.pop %v959
    %v961 = vmul.f32 %v956, %v960
    %962 = vrot.lane.b32.xlu0 %v653, 40
    %v963 = vpop.permute.xlu0 %962
    %v966 = vsel %vm135, %v961, 0
    %968 = vmatpush.msra.mxu0 0.0
    %969 = vmatpush.msra.mxu0 0.0
    %970 = vmatpush.msra.mxu0 0.0
    %971 = vmatpush.msra.mxu0 0.0
    %972 = vmatpush.msra.mxu0 0.0
    %973 = vmatpush.msra.mxu0 0.0
    %974 = vmatpush.msra.mxu0 0.0
    %975 = vmatpush.msra.mxu0 0.0
    %976 = vmatpush.msra.mxu0 0.0
    %977 = vmatpush.msra.mxu0 0.0
    %978 = vmatpush.msra.mxu0 0.0
    %979 = vmatpush.msra.mxu0 0.0
    %980 = vmatpush.msra.mxu0 0.0
    %981 = vmatpush.msra.mxu0 0.0
    %982 = vmatpush.msra.mxu0 0.0
    %983 = vmatpush.msra.mxu0 %v963
    %984 = vmatmul.f32.gmra.mxu0 %v966
    %v985 = vpop.f32.mrf.mxu0
    %v986 = vadd.f32 0.0, %v985
    %987 = vdwg.mxu0
    %v989 = vsel %vm135, %v986, 0
    %991 = vmatpush.msra.mxu0 0.0
    %992 = vmatpush.msra.mxu0 0.0
    %993 = vmatpush.msra.mxu0 0.0
    %994 = vmatpush.msra.mxu0 0.0
    %995 = vmatpush.msra.mxu0 0.0
    %996 = vmatpush.msra.mxu0 0.0
    %997 = vmatpush.msra.mxu0 0.0
    %998 = vmatpush.msra.mxu0 0.0
    %999 = vmatpush.msra.mxu0 0.0
    %1000 = vmatpush.msra.mxu0 0.0
    %1001 = vmatpush.msra.mxu0 0.0
    %1002 = vmatpush.msra.mxu0 0.0
    %1003 = vmatpush.msra.mxu0 0.0
    %1004 = vmatpush.msra.mxu0 0.0
    %1005 = vmatpush.msra.mxu0 0.0
    %1006 = vmatpush.msra.mxu0 %v608
    %1007 = vmatmul.f32.gmra.mxu0 %v989
    %v1008 = vpop.f32.mrf.mxu0
    %v1009 = vadd.f32 0.0, %v1008
    %1010 = vdwg.mxu0
    %v1011 = vadd.f32 %v922, %v1009
    %v1012 = vadd.f32 %v594, %v1011
    %v1013 = vsel %vm106, %v1012, 0.0
    %1014 = vadd.xlane.f32.xlu0 %v1013
    %v1015 = vpop.xlane.xlu0 %1014
    %v1016 = vmul.f32 %v1015, %v498
    %v1017 = vsub.f32 %v1012, %v1016
    %v1018 = vmul.f32 %v1017, %v1017
    %v1019 = vsel %vm106, %v1018, 0.0
    %1020 = vadd.xlane.f32.xlu0 %v1019
    %v1021 = vpop.xlane.xlu0 %1020
    %v1022 = vmul.f32 %v1021, %v498
    %v1023 = vadd.f32 %v1022, 1e-05
    %v1024 = vrsqrt.pop %v1023
    %v1025 = vmul.f32 %v1024, %v1023
    %v1026 = vmul.f32 %v1025, %v1024
    %v1027 = vmul.f32 0.5, %v1026
    %v1028 = vsub.f32 1.5, %v1027
    %v1029 = vmul.f32 %v1024, %v1028
    %vm1030 = vweird.f32 %v1023
    %vm1031 = vweird.f32 %v1024
    %vm1032 = vmor %vm1030, %vm1031
    %v1033 = vsel %vm1032, %v1024, %v1029
    %v1034 = vmul.f32 %v1017, %v1033
    %v1035 = vperm.slane %v627, 0
    %v1036 = vmul.f32 %v1034, %v1035
    %v1037 = vperm.slane %v628, 0
    %v1038 = vadd.f32 %v1036, %v1037
    %v1039 = vperm.slane %v604, 0
    %v1041 = vsel %vm106, %v1038, 0
    %1043 = vmatpush.msra.mxu0 0.0
    %1044 = vmatpush.msra.mxu0 0.0
    %1045 = vmatpush.msra.mxu0 0.0
    %1046 = vmatpush.msra.mxu0 0.0
    %1047 = vmatpush.msra.mxu0 0.0
    %1048 = vmatpush.msra.mxu0 0.0
    %1049 = vmatpush.msra.mxu0 0.0
    %1050 = vmatpush.msra.mxu0 0.0
    %1051 = vmatpush.msra.mxu0 0.0
    %1052 = vmatpush.msra.mxu0 0.0
    %1053 = vmatpush.msra.mxu0 0.0
    %1054 = vmatpush.msra.mxu0 0.0
    %1055 = vmatpush.msra.mxu0 %v603
    %1056 = vmatpush.msra.mxu0 %v602
    %1057 = vmatpush.msra.mxu0 %v601
    %1058 = vmatpush.msra.mxu0 %v600
    %1059 = vmatmul.f32.gmra.mxu0 %v1041
    %v1060 = vpop.f32.mrf.mxu0
    %v1061 = vadd.f32 %v1039, %v1060
    %1062 = vdwg.mxu0
    %v1063 = vmax.f32 %v1061, 0.0
    %v1064 = vperm.slane %v626, 0
    %1065 = vmatpush.msra.mxu0 %v624
    %1066 = vmatpush.msra.mxu0 %v623
    %1067 = vmatpush.msra.mxu0 %v622
    %1068 = vmatpush.msra.mxu0 %v621
    %1069 = vmatpush.msra.mxu0 %v620
    %1070 = vmatpush.msra.mxu0 %v619
    %1071 = vmatpush.msra.mxu0 %v618
    %1072 = vmatpush.msra.mxu0 %v617
    %1073 = vmatpush.msra.mxu0 %v616
    %1074 = vmatpush.msra.mxu0 %v615
    %1075 = vmatpush.msra.mxu0 %v614
    %1076 = vmatpush.msra.mxu0 %v613
    %1077 = vmatpush.msra.mxu0 %v612
    %1078 = vmatpush.msra.mxu0 %v611
    %1079 = vmatpush.msra.mxu0 %v610
    %1080 = vmatpush.msra.mxu0 %v609
    %1081 = vmatmul.f32.gmra.mxu0 %v1063
    %v1082 = vpop.f32.mrf.mxu0
    %v1083 = vadd.f32 %v1064, %v1082
    %1084 = vdwg.mxu0
    %v1085 = vadd.f32 %v1038, %v1083
    %v1086 = vsel %vm106, %v1085, 0.0
    %1087 = vadd.xlane.f32.xlu0 %v1086
    %v1088 = vpop.xlane.xlu0 %1087
    %v1089 = vmul.f32 %v1088, %v498
    %v1090 = vsub.f32 %v1085, %v1089
    %v1091 = vmul.f32 %v1090, %v1090
    %v1092 = vsel %vm106, %v1091, 0.0
    %1093 = vadd.xlane.f32.xlu0 %v1092
    %v1094 = vpop.xlane.xlu0 %1093
    %v1095 = vmul.f32 %v1094, %v498
    %v1096 = vadd.f32 %v1095, 1e-05
    %v1097 = vrsqrt.pop %v1096
    %v1098 = vmul.f32 %v1097, %v1096
    %v1099 = vmul.f32 %v1098, %v1097
    %v1100 = vmul.f32 0.5, %v1099
    %v1101 = vsub.f32 1.5, %v1100
    %v1102 = vmul.f32 %v1097, %v1101
    %vm1103 = vweird.f32 %v1096
    %vm1104 = vweird.f32 %v1097
    %vm1105 = vmor %vm1103, %vm1104
    %v1106 = vsel %vm1105, %v1097, %v1102
    %v1107 = vmul.f32 %v1090, %v1106
    %v1108 = vperm.slane %v629, 0
    %v1109 = vmul.f32 %v1107, %v1108
    %v1110 = vperm.slane %v630, 0
    %v1111 = vadd.f32 %v1109, %v1110
    %v1112 = vld [vmem:[%s4 + $0x150] sm:$0xff]
    %v1113 = vld [vmem:[%s4 + $0x158] sm:$0xff]
    %v1114 = vld [vmem:[%s4 + $0x160] sm:$0xff]
    %v1115 = vld [vmem:[%s4 + $0x168] sm:$0xff]
    %v1116 = vld [vmem:[%s4 + $0x170] sm:$0x1]
    %v1117 = vsel %vm106, %v1111, 0.0
    %v1118 = vrot.slane %v1117, 4
    %v1119 = vadd.f32 %v1117, %v1118
    %v1120 = vrot.slane %v1119, 2
    %v1121 = vadd.f32 %v1119, %v1120
    %v1122 = vrot.slane %v1121, 1
    %v1123 = vadd.f32 %v1121, %v1122
    %v1124 = vrcp.pop 8.0
    %v1125 = vmul.f32 8.0, %v1124
    %v1126 = vsub.f32 1.0, %v1125
    %v1127 = vmul.f32 %v1124, %v1126
    %v1128 = vadd.f32 %v1124, %v1127
    %vm1129 = vweird.f32 %v1124
    %v1130 = vsel %vm1129, %v1124, %v1128
    %v1131 = vmul.f32 %v1123, %v1130
    %v1133 = vsel %vm106, %v1131, 0
    %1135 = vmatpush.msra.mxu0 0.0
    %1136 = vmatpush.msra.mxu0 0.0
    %1137 = vmatpush.msra.mxu0 0.0
    %1138 = vmatpush.msra.mxu0 0.0
    %1139 = vmatpush.msra.mxu0 0.0
    %1140 = vmatpush.msra.mxu0 0.0
    %1141 = vmatpush.msra.mxu0 0.0
    %1142 = vmatpush.msra.mxu0 0.0
    %1143 = vmatpush.msra.mxu0 0.0
    %1144 = vmatpush.msra.mxu0 0.0
    %1145 = vmatpush.msra.mxu0 0.0
    %1146 = vmatpush.msra.mxu0 0.0
    %1147 = vmatpush.msra.mxu0 %v1115
    %1148 = vmatpush.msra.mxu0 %v1114
    %1149 = vmatpush.msra.mxu0 %v1113
    %1150 = vmatpush.msra.mxu0 %v1112
    %1151 = vmatmul.f32.gmra.mxu0 %v1133
    %v1152 = vpop.f32.mrf.mxu0
    %v1153 = vadd.f32 %v1116, %v1152
    %1154 = vdwg.mxu0
    %vm1155 = vcmask 261127
    %1156 = vst.msk [vmem:[%s5 - $0x7] sm:$0x80] %vm1155, %v1111
    %1157 = vst.msk [vmem:[%s5 + $0x1] sm:$0x1] %vm36, %v1153
    // Predicated region
    $region26: #{transformer_encoder_forward.1} parent=1 // pred_check
      _
    $region27: #{transformer_encoder_forward.1} parent=1 // pred_check_branch
      %1159 = sbr.rel (0) target = $region29
    $region28: #{transformer_encoder_forward.1} parent=1 // pred_region
      _
    $region29: #{transformer_encoder_forward.1} parent=1 // pred_fallthru
      _
    // Predicated region
    $region30: #{transformer_encoder_forward.1} parent=1 // pred_check
      _
    $region31: #{transformer_encoder_forward.1} parent=1 // pred_check_branch
      %1161 = sbr.rel (0) target = $region33
    $region32: #{transformer_encoder_forward.1} parent=1 // pred_region
      _
    $region33: #{transformer_encoder_forward.1} parent=1 // pred_fallthru
      _
    %1162 = vsyncpa [#allocation4], 1

</llo_original>
